<compile_context>
chip_gen: v5e
topology: v5e:2x2
jax: 0.10.0
libtpu: 0.0.40
codegen_flags: <defaults>
</compile_context>

<pallas_src>
import functools
import math

import jax
import jax.numpy as jnp
import numpy as np
from jax.experimental import pallas as pl
from jax.experimental.pallas import tpu as pltpu


def _layernorm(y, gamma, beta, eps=1e-5):
    # PyTorch nn.LayerNorm semantics: biased variance over last dim, eps=1e-5.
    mu = jnp.mean(y, axis=-1, keepdims=True)
    var = jnp.mean((y - mu) ** 2, axis=-1, keepdims=True)
    return (y - mu) * jax.lax.rsqrt(var + eps) * gamma + beta


def _tpu_budget():
    """(vmem_limit_bytes, query-tile target) tuned per TPU generation."""
    cap = 64 * 1024 * 1024
    try:
        cap = int(pltpu.get_tpu_info().vmem_capacity_bytes)
    except Exception:
        pass  # conservative v7x-sized default
    if cap >= 100 * 1024 * 1024:           # v5e / v6e: 128 MiB per core
        return 100 * 1024 * 1024, 256
    return 48 * 1024 * 1024, 128           # v7x: 64 MiB per core


def _pick_q_tile(n, target=128):
    """Largest query tile <= target dividing n; prefer sublane-16 alignment."""
    if n <= target:
        return n
    for align in (16, 8):
        for t in range(min(target, n), align - 1, -1):
            if n % t == 0 and t % align == 0:
                return t
    # TODO(synk): for large awkward N this keeps one full-length tile; pad N
    #             (or switch to a flash-style key-tile loop) instead.
    return n


def vit_block_kernel(xq_ref, xkv_ref, *refs, num_heads, head_dim, qkv_bias):
    """One (batch, query-tile) grid point of a VisionTransformerBlock.

    refs = [wq, wkv, (bq, bkv if qkv_bias), wproj, bproj,
            ln1_g, ln1_b, w1, b1, w2, b2, ln2_g, ln2_b, o_ref]
    """
    o_ref = refs[-1]
    p = list(refs[:-1])
    wq_ref = p.pop(0)
    wkv_ref = p.pop(0)
    if qkv_bias:
        bq_ref = p.pop(0)
        bkv_ref = p.pop(0)
    (wproj_ref, bproj_ref, g1_ref, be1_ref,
     w1_ref, b1_ref, w2_ref, b2_ref, g2_ref, be2_ref) = p

    f32 = jnp.float32
    bf16 = jnp.bfloat16
    C = num_heads * head_dim
    scale = 1.0 / math.sqrt(head_dim)

    xq = xq_ref[0].astype(f32)      # (TQ, C)  query-token tile, f32 residual
    xq_b = xq.astype(bf16)
    xkv_b = xkv_ref[0]              # (N,  C)  full token set, already bf16

    # ---------------- PatchAttention -----------------------------------------
    # Fused, lane-dense projections (full MXU output width, f32 accumulation).
    q_all = jnp.dot(xq_b, wq_ref[...], preferred_element_type=f32)      # (TQ, C)
    kv_all = jnp.dot(xkv_b, wkv_ref[...], preferred_element_type=f32)   # (N, 2C)
    if qkv_bias:
        q_all = q_all + bq_ref[...]
        kv_all = kv_all + bkv_ref[...]
    q_all = (q_all * scale).astype(bf16)   # fold 1/sqrt(hd) into the small q
    k_all = kv_all[:, :C].astype(bf16)
    v_all = kv_all[:, C:].astype(bf16)

    # Per-head scores / softmax / prob @ V; head outputs re-packed lane-dense.
    # TODO(synk): for large token counts switch to a flash-style online softmax
    #             over key tiles instead of materializing full (TQ, N) scores.
    head_outs = []
    for h in range(num_heads):                       # static unroll, small H
        sl = slice(h * head_dim, (h + 1) * head_dim)
        q = q_all[:, sl]
        k = k_all[:, sl]
        v = v_all[:, sl]
        s = jax.lax.dot_general(q, k, (((1,), (1,)), ((), ())),
                                preferred_element_type=f32)             # (TQ, N)
        s = s - jnp.max(s, axis=-1, keepdims=True)                      # f32 softmax
        e = jnp.exp(s)
        prob = e * pl.reciprocal(jnp.sum(e, axis=-1, keepdims=True), approx=True)
        head_outs.append(jnp.dot(prob.astype(bf16), v,
                                 preferred_element_type=f32))           # (TQ, hd)
    attn_cat = jnp.concatenate(head_outs, axis=-1).astype(bf16)         # (TQ, C)

    # Single full-width output projection (K = C contraction, no per-head adds).
    attn = jnp.dot(attn_cat, wproj_ref[...],
                   preferred_element_type=f32) + bproj_ref[...]         # (TQ, C)

    # residual + post-norm (forward_attn: attn -> norm1 -> identity drop_path)
    x1 = xq + _layernorm(attn, g1_ref[...], be1_ref[...])

    # ---------------- MLP branch ----------------------------------------------
    h1 = jnp.dot(x1.astype(bf16), w1_ref[...],
                 preferred_element_type=f32) + b1_ref[...]               # (TQ, H)
    # TODO(synk): torch nn.GELU default is exact erf GELU; tanh approximation
    #             is used here to guarantee Mosaic lowering (tiny numeric delta).
    h1 = jax.nn.gelu(h1, approximate=True)
    m = jnp.dot(h1.astype(bf16), w2_ref[...],
                preferred_element_type=f32) + b2_ref[...]                # (TQ, C)

    # residual + post-norm (forward_mlp: mlp -> norm2 -> identity drop_path)
    out = x1 + _layernorm(m, g2_ref[...], be2_ref[...])
    o_ref[0] = out.astype(o_ref.dtype)


def vit_block_apply(x, x_kv, params, num_heads, qkv_bias=False,
                    vmem_limit=48 * 1024 * 1024, tq_target=128):
    """One VisionTransformerBlock.  x: (B, N, C) f32; x_kv: (B, N, C) bf16."""
    B, N, C = x.shape
    head_dim = C // num_heads
    hidden = params["w1"].shape[-1]
    tq = _pick_q_tile(N, tq_target)
    nq = N // tq

    names = ["wq", "wkv"]
    if qkv_bias:
        names += ["bq", "bkv"]
    names += ["wproj", "bproj", "ln1_g", "ln1_b",
              "w1", "b1", "w2", "b2", "ln2_g", "ln2_b"]
    plist = [params[n] for n in names]

    kernel = functools.partial(
        vit_block_kernel, num_heads=num_heads, head_dim=head_dim,
        qkv_bias=qkv_bias)

    def _const_map(ndim):
        zeros = (0,) * ndim
        return lambda b, q: zeros

    in_specs = [
        pl.BlockSpec((1, tq, C), lambda b, q: (b, q, 0)),   # query tile (f32)
        pl.BlockSpec((1, N, C), lambda b, q: (b, 0, 0)),    # full tokens (bf16)
    ]
    # Weights: constant block index across the grid -> Pallas re-uses the
    # resident block (no re-DMA between grid steps).
    # TODO(synk): pipeline_mode=pl.Buffered(1) on these constant-index specs
    #             would halve their VMEM footprint on v7x; left at default
    #             buffering to keep lowering conservative.
    in_specs += [pl.BlockSpec(w.shape, _const_map(w.ndim)) for w in plist]

    # Advisory scheduling hint for XLA.
    flops = int(2 * B * N * 4 * C * C + 4 * B * N * N * C
                + 4 * B * N * C * hidden)
    transcendentals = int(B * num_heads * N * N + B * N * hidden)
    bytes_accessed = int(
        B * N * C * (4 + 2 + 4)
        + sum(int(w.size) * w.dtype.itemsize for w in plist))

    return pl.pallas_call(
        kernel,
        out_shape=jax.ShapeDtypeStruct((B, N, C), x.dtype),
        grid=(B, nq),
        in_specs=in_specs,
        out_specs=pl.BlockSpec((1, tq, C), lambda b, q: (b, q, 0)),
        compiler_params=pltpu.CompilerParams(
            dimension_semantics=("parallel", "parallel"),
            vmem_limit_bytes=vmem_limit,
        ),
        cost_estimate=pl.CostEstimate(
            flops=flops, transcendentals=transcendentals,
            bytes_accessed=bytes_accessed),
    )(x, x_kv, *plist)


def init_block_params(key, dim, num_heads, mlp_ratio, qkv_bias=False):
    """Deterministic synthetic parameters for one block, in kernel layout.

    Linear weights are pre-transposed (x @ W + b == torch x @ W.T + b), stored
    bf16.  The fused torch qkv weight (3C, C) maps to
      wq  = W_qkv.T[:, :C]   -> (C, C)
      wkv = W_qkv.T[:, C:3C] -> (C, 2C)  (k columns first, then v),
    output columns ordered (head, head_dim), so q_all[:, h*hd:(h+1)*hd] in the
    kernel is exactly torch's per-head split.  Biases / LayerNorm stay f32.
    """
    hidden = int(dim * mlp_ratio)
    ks = jax.random.split(key, 8)
    std = 0.02
    f32, bf16 = jnp.float32, jnp.bfloat16

    params = {
        "wq": (jax.random.normal(ks[0], (dim, dim), f32) * std).astype(bf16),
        "wkv": (jax.random.normal(ks[1], (dim, 2 * dim), f32) * std).astype(bf16),
        "wproj": (jax.random.normal(ks[2], (dim, dim), f32) * std).astype(bf16),
        "bproj": jax.random.normal(ks[3], (1, dim), f32) * std,
        "ln1_g": jnp.ones((1, dim), f32),
        "ln1_b": jnp.zeros((1, dim), f32),
        "w1": (jax.random.normal(ks[4], (dim, hidden), f32) * std).astype(bf16),
        "b1": jnp.zeros((1, hidden), f32),
        "w2": (jax.random.normal(ks[5], (hidden, dim), f32) * std).astype(bf16),
        "b2": jnp.zeros((1, dim), f32),
        "ln2_g": jnp.ones((1, dim), f32),
        "ln2_b": jnp.zeros((1, dim), f32),
    }
    if qkv_bias:
        params["bq"] = jax.random.normal(ks[6], (1, dim), f32) * std
        params["bkv"] = jax.random.normal(ks[7], (1, 2 * dim), f32) * std
    return params


def vit_layer_forward(x, blocks_params, num_heads, qkv_bias=False):
    """ViTLayer.forward: sequentially apply `depth` transformer blocks."""
    B = x.shape[0]
    C = x.shape[-1]
    spatial = x.shape[1:-1]
    N = math.prod(spatial)
    vmem_limit, tq_target = _tpu_budget()
    xt = x.reshape(B, N, C)
    for p in blocks_params:
        xkv = xt.astype(jnp.bfloat16)   # cast once per block, outside kernel
        xt = vit_block_apply(xt, xkv, p, num_heads, qkv_bias=qkv_bias,
                             vmem_limit=vmem_limit, tq_target=tq_target)
    return xt.reshape(B, *spatial, C)


# --------------------------- pure-JAX reference ------------------------------
def _vit_block_ref(x, params, num_heads, qkv_bias=False):
    B, N, C = x.shape
    hd = C // num_heads
    f32 = jnp.float32
    q = x @ params["wq"].astype(f32)
    kv = x @ params["wkv"].astype(f32)
    if qkv_bias:
        q = q + params["bq"]
        kv = kv + params["bkv"]
    k, v = kv[..., :C], kv[..., C:]

    def split(t):
        return t.reshape(B, N, num_heads, hd).transpose(0, 2, 1, 3)

    qh, kh, vh = split(q), split(k), split(v)
    s = jnp.einsum("bhqd,bhkd->bhqk", qh, kh) / math.sqrt(hd)
    p = jax.nn.softmax(s, axis=-1)
    o = jnp.einsum("bhqk,bhkd->bhqd", p, vh)
    o = o.transpose(0, 2, 1, 3).reshape(B, N, C)
    attn = o @ params["wproj"].astype(f32) + params["bproj"]

    def ln(y, g, b):
        mu = jnp.mean(y, -1, keepdims=True)
        var = jnp.mean((y - mu) ** 2, -1, keepdims=True)
        return (y - mu) * jax.lax.rsqrt(var + 1e-5) * g + b

    x = x + ln(attn, params["ln1_g"], params["ln1_b"])
    h1 = jax.nn.gelu(x @ params["w1"].astype(f32) + params["b1"],
                     approximate=True)
    m = h1 @ params["w2"].astype(f32) + params["b2"]
    x = x + ln(m, params["ln2_g"], params["ln2_b"])
    return x


def _vit_layer_ref(x, blocks_params, num_heads, qkv_bias=False):
    B, C = x.shape[0], x.shape[-1]
    spatial = x.shape[1:-1]
    xt = x.reshape(B, math.prod(spatial), C)
    for p in blocks_params:
        xt = _vit_block_ref(xt, p, num_heads, qkv_bias=qkv_bias)
    return xt.reshape(B, *spatial, C)


if __name__ == "__main__":
    B = 2
    dim = 32
    num_heads = 4          # head_dim = 8
    depth = 2
    grid_size = (4, 4)     # N = 16 tokens
    mlp_ratio = 4.0        # hidden = 128
    qkv_bias = False       # ViTLayer default

    key = jax.random.PRNGKey(0)
    kx, kp = jax.random.split(key)
    x = jax.random.normal(kx, (B, *grid_size, dim), jnp.float32)

    block_keys = jax.random.split(kp, depth)
    blocks_params = [
        init_block_params(k, dim, num_heads, mlp_ratio, qkv_bias=qkv_bias)
        for k in block_keys
    ]

    out = vit_layer_forward(x, blocks_params, num_heads, qkv_bias=qkv_bias)
    jax.block_until_ready(out)
    assert out.shape == (B, *grid_size, dim)

    ref = _vit_layer_ref(x, blocks_params, num_heads, qkv_bias=qkv_bias)
    np.testing.assert_allclose(np.asarray(out), np.asarray(ref),
                               rtol=5e-2, atol=5e-2)
    print("KERNEL_OK")
</pallas_src>

<mosaic_0001>
module attributes {stable_mosaic.version = 11 : i64} {
  func.func @vit_block_kernel(%arg0: i32, %arg1: i32, %arg2: memref<1x16x32xf32, #tpu.memory_space<vmem>>, %arg3: memref<1x16x32xbf16, #tpu.memory_space<vmem>>, %arg4: memref<32x32xbf16, #tpu.memory_space<vmem>>, %arg5: memref<32x64xbf16, #tpu.memory_space<vmem>>, %arg6: memref<32x32xbf16, #tpu.memory_space<vmem>>, %arg7: memref<1x32xf32, #tpu.memory_space<vmem>>, %arg8: memref<1x32xf32, #tpu.memory_space<vmem>>, %arg9: memref<1x32xf32, #tpu.memory_space<vmem>>, %arg10: memref<32x128xbf16, #tpu.memory_space<vmem>>, %arg11: memref<1x128xf32, #tpu.memory_space<vmem>>, %arg12: memref<128x32xbf16, #tpu.memory_space<vmem>>, %arg13: memref<1x32xf32, #tpu.memory_space<vmem>>, %arg14: memref<1x32xf32, #tpu.memory_space<vmem>>, %arg15: memref<1x32xf32, #tpu.memory_space<vmem>>, %arg16: memref<1x16x32xf32, #tpu.memory_space<vmem>>) attributes {dimension_semantics = [#tpu.dimension_semantics<parallel>, #tpu.dimension_semantics<parallel>], iteration_bounds = array<i64: 2, 1>, scalar_prefetch = 0 : i64, scratch_operands = 0 : i64, tpu.core_type = #tpu.core_type<tc>, window_params = [{transform_indices = @transform_0, window_bounds = array<i64: 1, 16, 32>}, {transform_indices = @transform_1, window_bounds = array<i64: 1, 16, 32>}, {pipeline_mode = #tpu.pipeline_mode<synchronous>, transform_indices = @transform_2, window_bounds = array<i64: 32, 32>}, {pipeline_mode = #tpu.pipeline_mode<synchronous>, transform_indices = @transform_3, window_bounds = array<i64: 32, 64>}, {pipeline_mode = #tpu.pipeline_mode<synchronous>, transform_indices = @transform_4, window_bounds = array<i64: 32, 32>}, {pipeline_mode = #tpu.pipeline_mode<synchronous>, transform_indices = @transform_5, window_bounds = array<i64: 1, 32>}, {pipeline_mode = #tpu.pipeline_mode<synchronous>, transform_indices = @transform_6, window_bounds = array<i64: 1, 32>}, {pipeline_mode = #tpu.pipeline_mode<synchronous>, transform_indices = @transform_7, window_bounds = array<i64: 1, 32>}, {pipeline_mode = #tpu.pipeline_mode<synchronous>, transform_indices = @transform_8, window_bounds = array<i64: 32, 128>}, {pipeline_mode = #tpu.pipeline_mode<synchronous>, transform_indices = @transform_9, window_bounds = array<i64: 1, 128>}, {pipeline_mode = #tpu.pipeline_mode<synchronous>, transform_indices = @transform_10, window_bounds = array<i64: 128, 32>}, {pipeline_mode = #tpu.pipeline_mode<synchronous>, transform_indices = @transform_11, window_bounds = array<i64: 1, 32>}, {pipeline_mode = #tpu.pipeline_mode<synchronous>, transform_indices = @transform_12, window_bounds = array<i64: 1, 32>}, {pipeline_mode = #tpu.pipeline_mode<synchronous>, transform_indices = @transform_13, window_bounds = array<i64: 1, 32>}, {transform_indices = @transform_14, window_bounds = array<i64: 1, 16, 32>}]} {
    %c0 = arith.constant 0 : index
    %c0_0 = arith.constant 0 : index
    %c0_1 = arith.constant 0 : index
    %0 = vector.load %arg2[%c0, %c0_0, %c0_1] : memref<1x16x32xf32, #tpu.memory_space<vmem>>, vector<1x16x32xf32>
    %1 = vector.shape_cast %0 : vector<1x16x32xf32> to vector<16x32xf32>
    %2 = arith.truncf %1 : vector<16x32xf32> to vector<16x32xbf16>
    %c0_2 = arith.constant 0 : index
    %c0_3 = arith.constant 0 : index
    %c0_4 = arith.constant 0 : index
    %3 = vector.load %arg3[%c0_2, %c0_3, %c0_4] : memref<1x16x32xbf16, #tpu.memory_space<vmem>>, vector<1x16x32xbf16>
    %4 = vector.shape_cast %3 : vector<1x16x32xbf16> to vector<16x32xbf16>
    %c0_5 = arith.constant 0 : index
    %c0_6 = arith.constant 0 : index
    %5 = vector.load %arg4[%c0_5, %c0_6] : memref<32x32xbf16, #tpu.memory_space<vmem>>, vector<32x32xbf16>
    %cst = arith.constant dense<0.000000e+00> : vector<16x32xf32>
    %6 = tpu.matmul %2, %5, %cst {dimension_numbers = #tpu.dot_dimension_numbers<[1], [0], [0], [1], [0, 0, 1, 1], [], []>} : vector<16x32xbf16>, vector<32x32xbf16>, vector<16x32xf32> -> vector<16x32xf32>
    %c0_7 = arith.constant 0 : index
    %c0_8 = arith.constant 0 : index
    %7 = vector.load %arg5[%c0_7, %c0_8] : memref<32x64xbf16, #tpu.memory_space<vmem>>, vector<32x64xbf16>
    %cst_9 = arith.constant dense<0.000000e+00> : vector<16x64xf32>
    %8 = tpu.matmul %4, %7, %cst_9 {dimension_numbers = #tpu.dot_dimension_numbers<[1], [0], [0], [1], [0, 0, 1, 1], [], []>} : vector<16x32xbf16>, vector<32x64xbf16>, vector<16x64xf32> -> vector<16x64xf32>
    %cst_10 = arith.constant 0.353553385 : f32
    %9 = vector.broadcast %cst_10 : f32 to vector<16x32xf32>
    %10 = arith.mulf %6, %9 : vector<16x32xf32>
    %11 = arith.truncf %10 : vector<16x32xf32> to vector<16x32xbf16>
    %12 = vector.extract_strided_slice %8 {offsets = [0, 0], sizes = [16, 32], strides = [1, 1]} : vector<16x64xf32> to vector<16x32xf32>
    %13 = arith.truncf %12 : vector<16x32xf32> to vector<16x32xbf16>
    %14 = vector.extract_strided_slice %8 {offsets = [0, 32], sizes = [16, 32], strides = [1, 1]} : vector<16x64xf32> to vector<16x32xf32>
    %15 = arith.truncf %14 : vector<16x32xf32> to vector<16x32xbf16>
    %16 = vector.extract_strided_slice %11 {offsets = [0, 0], sizes = [16, 8], strides = [1, 1]} : vector<16x32xbf16> to vector<16x8xbf16>
    %17 = vector.extract_strided_slice %13 {offsets = [0, 0], sizes = [16, 8], strides = [1, 1]} : vector<16x32xbf16> to vector<16x8xbf16>
    %18 = vector.extract_strided_slice %15 {offsets = [0, 0], sizes = [16, 8], strides = [1, 1]} : vector<16x32xbf16> to vector<16x8xbf16>
    %cst_11 = arith.constant dense<0.000000e+00> : vector<16x16xf32>
    %19 = tpu.matmul %16, %17, %cst_11 {dimension_numbers = #tpu.dot_dimension_numbers<[1], [1], [0], [0], [0, 0, 1, 0], [], []>} : vector<16x8xbf16>, vector<16x8xbf16>, vector<16x16xf32> -> vector<16x16xf32>
    %cst_12 = arith.constant dense<0xFF800000> : vector<16xf32>
    %20 = vector.multi_reduction <maximumf>, %19, %cst_12 [1] : vector<16x16xf32> to vector<16xf32>
    %21 = vector.shape_cast %20 : vector<16xf32> to vector<16x1xf32>
    %22 = vector.broadcast %21 : vector<16x1xf32> to vector<16x16xf32>
    %23 = arith.subf %19, %22 : vector<16x16xf32>
    %24 = math.exp %23 : vector<16x16xf32>
    %cst_13 = arith.constant dense<0.000000e+00> : vector<16xf32>
    %25 = vector.multi_reduction <add>, %24, %cst_13 [1] : vector<16x16xf32> to vector<16xf32>
    %26 = vector.shape_cast %25 : vector<16xf32> to vector<16x1xf32>
    %27 = tpu.reciprocal %26 {approx = true} : vector<16x1xf32> -> vector<16x1xf32>
    %28 = vector.broadcast %27 : vector<16x1xf32> to vector<16x16xf32>
    %29 = arith.mulf %24, %28 : vector<16x16xf32>
    %30 = arith.truncf %29 : vector<16x16xf32> to vector<16x16xbf16>
    %cst_14 = arith.constant dense<0.000000e+00> : vector<16x8xf32>
    %31 = tpu.matmul %30, %18, %cst_14 {dimension_numbers = #tpu.dot_dimension_numbers<[1], [0], [0], [1], [0, 0, 1, 1], [], []>} : vector<16x16xbf16>, vector<16x8xbf16>, vector<16x8xf32> -> vector<16x8xf32>
    %32 = vector.extract_strided_slice %11 {offsets = [0, 8], sizes = [16, 8], strides = [1, 1]} : vector<16x32xbf16> to vector<16x8xbf16>
    %33 = vector.extract_strided_slice %13 {offsets = [0, 8], sizes = [16, 8], strides = [1, 1]} : vector<16x32xbf16> to vector<16x8xbf16>
    %34 = vector.extract_strided_slice %15 {offsets = [0, 8], sizes = [16, 8], strides = [1, 1]} : vector<16x32xbf16> to vector<16x8xbf16>
    %cst_15 = arith.constant dense<0.000000e+00> : vector<16x16xf32>
    %35 = tpu.matmul %32, %33, %cst_15 {dimension_numbers = #tpu.dot_dimension_numbers<[1], [1], [0], [0], [0, 0, 1, 0], [], []>} : vector<16x8xbf16>, vector<16x8xbf16>, vector<16x16xf32> -> vector<16x16xf32>
    %cst_16 = arith.constant dense<0xFF800000> : vector<16xf32>
    %36 = vector.multi_reduction <maximumf>, %35, %cst_16 [1] : vector<16x16xf32> to vector<16xf32>
    %37 = vector.shape_cast %36 : vector<16xf32> to vector<16x1xf32>
    %38 = vector.broadcast %37 : vector<16x1xf32> to vector<16x16xf32>
    %39 = arith.subf %35, %38 : vector<16x16xf32>
    %40 = math.exp %39 : vector<16x16xf32>
    %cst_17 = arith.constant dense<0.000000e+00> : vector<16xf32>
    %41 = vector.multi_reduction <add>, %40, %cst_17 [1] : vector<16x16xf32> to vector<16xf32>
    %42 = vector.shape_cast %41 : vector<16xf32> to vector<16x1xf32>
    %43 = tpu.reciprocal %42 {approx = true} : vector<16x1xf32> -> vector<16x1xf32>
    %44 = vector.broadcast %43 : vector<16x1xf32> to vector<16x16xf32>
    %45 = arith.mulf %40, %44 : vector<16x16xf32>
    %46 = arith.truncf %45 : vector<16x16xf32> to vector<16x16xbf16>
    %cst_18 = arith.constant dense<0.000000e+00> : vector<16x8xf32>
    %47 = tpu.matmul %46, %34, %cst_18 {dimension_numbers = #tpu.dot_dimension_numbers<[1], [0], [0], [1], [0, 0, 1, 1], [], []>} : vector<16x16xbf16>, vector<16x8xbf16>, vector<16x8xf32> -> vector<16x8xf32>
    %48 = vector.extract_strided_slice %11 {offsets = [0, 16], sizes = [16, 8], strides = [1, 1]} : vector<16x32xbf16> to vector<16x8xbf16>
    %49 = vector.extract_strided_slice %13 {offsets = [0, 16], sizes = [16, 8], strides = [1, 1]} : vector<16x32xbf16> to vector<16x8xbf16>
    %50 = vector.extract_strided_slice %15 {offsets = [0, 16], sizes = [16, 8], strides = [1, 1]} : vector<16x32xbf16> to vector<16x8xbf16>
    %cst_19 = arith.constant dense<0.000000e+00> : vector<16x16xf32>
    %51 = tpu.matmul %48, %49, %cst_19 {dimension_numbers = #tpu.dot_dimension_numbers<[1], [1], [0], [0], [0, 0, 1, 0], [], []>} : vector<16x8xbf16>, vector<16x8xbf16>, vector<16x16xf32> -> vector<16x16xf32>
    %cst_20 = arith.constant dense<0xFF800000> : vector<16xf32>
    %52 = vector.multi_reduction <maximumf>, %51, %cst_20 [1] : vector<16x16xf32> to vector<16xf32>
    %53 = vector.shape_cast %52 : vector<16xf32> to vector<16x1xf32>
    %54 = vector.broadcast %53 : vector<16x1xf32> to vector<16x16xf32>
    %55 = arith.subf %51, %54 : vector<16x16xf32>
    %56 = math.exp %55 : vector<16x16xf32>
    %cst_21 = arith.constant dense<0.000000e+00> : vector<16xf32>
    %57 = vector.multi_reduction <add>, %56, %cst_21 [1] : vector<16x16xf32> to vector<16xf32>
    %58 = vector.shape_cast %57 : vector<16xf32> to vector<16x1xf32>
    %59 = tpu.reciprocal %58 {approx = true} : vector<16x1xf32> -> vector<16x1xf32>
    %60 = vector.broadcast %59 : vector<16x1xf32> to vector<16x16xf32>
    %61 = arith.mulf %56, %60 : vector<16x16xf32>
    %62 = arith.truncf %61 : vector<16x16xf32> to vector<16x16xbf16>
    %cst_22 = arith.constant dense<0.000000e+00> : vector<16x8xf32>
    %63 = tpu.matmul %62, %50, %cst_22 {dimension_numbers = #tpu.dot_dimension_numbers<[1], [0], [0], [1], [0, 0, 1, 1], [], []>} : vector<16x16xbf16>, vector<16x8xbf16>, vector<16x8xf32> -> vector<16x8xf32>
    %64 = vector.extract_strided_slice %11 {offsets = [0, 24], sizes = [16, 8], strides = [1, 1]} : vector<16x32xbf16> to vector<16x8xbf16>
    %65 = vector.extract_strided_slice %13 {offsets = [0, 24], sizes = [16, 8], strides = [1, 1]} : vector<16x32xbf16> to vector<16x8xbf16>
    %66 = vector.extract_strided_slice %15 {offsets = [0, 24], sizes = [16, 8], strides = [1, 1]} : vector<16x32xbf16> to vector<16x8xbf16>
    %cst_23 = arith.constant dense<0.000000e+00> : vector<16x16xf32>
    %67 = tpu.matmul %64, %65, %cst_23 {dimension_numbers = #tpu.dot_dimension_numbers<[1], [1], [0], [0], [0, 0, 1, 0], [], []>} : vector<16x8xbf16>, vector<16x8xbf16>, vector<16x16xf32> -> vector<16x16xf32>
    %cst_24 = arith.constant dense<0xFF800000> : vector<16xf32>
    %68 = vector.multi_reduction <maximumf>, %67, %cst_24 [1] : vector<16x16xf32> to vector<16xf32>
    %69 = vector.shape_cast %68 : vector<16xf32> to vector<16x1xf32>
    %70 = vector.broadcast %69 : vector<16x1xf32> to vector<16x16xf32>
    %71 = arith.subf %67, %70 : vector<16x16xf32>
    %72 = math.exp %71 : vector<16x16xf32>
    %cst_25 = arith.constant dense<0.000000e+00> : vector<16xf32>
    %73 = vector.multi_reduction <add>, %72, %cst_25 [1] : vector<16x16xf32> to vector<16xf32>
    %74 = vector.shape_cast %73 : vector<16xf32> to vector<16x1xf32>
    %75 = tpu.reciprocal %74 {approx = true} : vector<16x1xf32> -> vector<16x1xf32>
    %76 = vector.broadcast %75 : vector<16x1xf32> to vector<16x16xf32>
    %77 = arith.mulf %72, %76 : vector<16x16xf32>
    %78 = arith.truncf %77 : vector<16x16xf32> to vector<16x16xbf16>
    %cst_26 = arith.constant dense<0.000000e+00> : vector<16x8xf32>
    %79 = tpu.matmul %78, %66, %cst_26 {dimension_numbers = #tpu.dot_dimension_numbers<[1], [0], [0], [1], [0, 0, 1, 1], [], []>} : vector<16x16xbf16>, vector<16x8xbf16>, vector<16x8xf32> -> vector<16x8xf32>
    %80 = tpu.concatenate %31, %47, %63, %79 in 1 : vector<16x8xf32>, vector<16x8xf32>, vector<16x8xf32>, vector<16x8xf32> -> vector<16x32xf32>
    %81 = arith.truncf %80 : vector<16x32xf32> to vector<16x32xbf16>
    %c0_27 = arith.constant 0 : index
    %c0_28 = arith.constant 0 : index
    %82 = vector.load %arg6[%c0_27, %c0_28] : memref<32x32xbf16, #tpu.memory_space<vmem>>, vector<32x32xbf16>
    %cst_29 = arith.constant dense<0.000000e+00> : vector<16x32xf32>
    %83 = tpu.matmul %81, %82, %cst_29 {dimension_numbers = #tpu.dot_dimension_numbers<[1], [0], [0], [1], [0, 0, 1, 1], [], []>} : vector<16x32xbf16>, vector<32x32xbf16>, vector<16x32xf32> -> vector<16x32xf32>
    %c0_30 = arith.constant 0 : index
    %c0_31 = arith.constant 0 : index
    %84 = vector.load %arg7[%c0_30, %c0_31] : memref<1x32xf32, #tpu.memory_space<vmem>>, vector<1x32xf32>
    %85 = vector.broadcast %84 : vector<1x32xf32> to vector<16x32xf32>
    %86 = arith.addf %83, %85 : vector<16x32xf32>
    %c0_32 = arith.constant 0 : index
    %c0_33 = arith.constant 0 : index
    %87 = vector.load %arg8[%c0_32, %c0_33] : memref<1x32xf32, #tpu.memory_space<vmem>>, vector<1x32xf32>
    %c0_34 = arith.constant 0 : index
    %c0_35 = arith.constant 0 : index
    %88 = vector.load %arg9[%c0_34, %c0_35] : memref<1x32xf32, #tpu.memory_space<vmem>>, vector<1x32xf32>
    %cst_36 = arith.constant dense<0.000000e+00> : vector<16xf32>
    %89 = vector.multi_reduction <add>, %86, %cst_36 [1] : vector<16x32xf32> to vector<16xf32>
    %90 = vector.shape_cast %89 : vector<16xf32> to vector<16x1xf32>
    %cst_37 = arith.constant 3.200000e+01 : f32
    %91 = vector.broadcast %cst_37 : f32 to vector<16x1xf32>
    %92 = arith.divf %90, %91 : vector<16x1xf32>
    %93 = vector.broadcast %92 : vector<16x1xf32> to vector<16x32xf32>
    %94 = arith.subf %86, %93 : vector<16x32xf32>
    %95 = arith.mulf %94, %94 : vector<16x32xf32>
    %cst_38 = arith.constant dense<0.000000e+00> : vector<16xf32>
    %96 = vector.multi_reduction <add>, %95, %cst_38 [1] : vector<16x32xf32> to vector<16xf32>
    %97 = vector.shape_cast %96 : vector<16xf32> to vector<16x1xf32>
    %cst_39 = arith.constant 3.200000e+01 : f32
    %98 = vector.broadcast %cst_39 : f32 to vector<16x1xf32>
    %99 = arith.divf %97, %98 : vector<16x1xf32>
    %100 = vector.broadcast %92 : vector<16x1xf32> to vector<16x32xf32>
    %101 = arith.subf %86, %100 : vector<16x32xf32>
    %cst_40 = arith.constant 9.99999974E-6 : f32
    %102 = vector.broadcast %cst_40 : f32 to vector<16x1xf32>
    %103 = arith.addf %99, %102 : vector<16x1xf32>
    %104 = math.rsqrt %103 : vector<16x1xf32>
    %105 = vector.broadcast %104 : vector<16x1xf32> to vector<16x32xf32>
    %106 = arith.mulf %101, %105 : vector<16x32xf32>
    %107 = vector.broadcast %87 : vector<1x32xf32> to vector<16x32xf32>
    %108 = arith.mulf %106, %107 : vector<16x32xf32>
    %109 = vector.broadcast %88 : vector<1x32xf32> to vector<16x32xf32>
    %110 = arith.addf %108, %109 : vector<16x32xf32>
    %111 = arith.addf %1, %110 : vector<16x32xf32>
    %112 = arith.truncf %111 : vector<16x32xf32> to vector<16x32xbf16>
    %c0_41 = arith.constant 0 : index
    %c0_42 = arith.constant 0 : index
    %113 = vector.load %arg10[%c0_41, %c0_42] : memref<32x128xbf16, #tpu.memory_space<vmem>>, vector<32x128xbf16>
    %cst_43 = arith.constant dense<0.000000e+00> : vector<16x128xf32>
    %114 = tpu.matmul %112, %113, %cst_43 {dimension_numbers = #tpu.dot_dimension_numbers<[1], [0], [0], [1], [0, 0, 1, 1], [], []>} : vector<16x32xbf16>, vector<32x128xbf16>, vector<16x128xf32> -> vector<16x128xf32>
    %c0_44 = arith.constant 0 : index
    %c0_45 = arith.constant 0 : index
    %115 = vector.load %arg11[%c0_44, %c0_45] : memref<1x128xf32, #tpu.memory_space<vmem>>, vector<1x128xf32>
    %116 = vector.broadcast %115 : vector<1x128xf32> to vector<16x128xf32>
    %117 = arith.addf %114, %116 : vector<16x128xf32>
    %118 = arith.mulf %117, %117 : vector<16x128xf32>
    %119 = arith.mulf %117, %118 : vector<16x128xf32>
    %cst_46 = arith.constant 4.471500e-02 : f32
    %120 = vector.broadcast %cst_46 : f32 to vector<16x128xf32>
    %121 = arith.mulf %120, %119 : vector<16x128xf32>
    %122 = arith.addf %117, %121 : vector<16x128xf32>
    %cst_47 = arith.constant 0.797884583 : f32
    %123 = vector.broadcast %cst_47 : f32 to vector<16x128xf32>
    %124 = arith.mulf %123, %122 : vector<16x128xf32>
    %125 = math.tanh %124 : vector<16x128xf32>
    %cst_48 = arith.constant 1.000000e+00 : f32
    %126 = vector.broadcast %cst_48 : f32 to vector<16x128xf32>
    %127 = arith.addf %126, %125 : vector<16x128xf32>
    %cst_49 = arith.constant 5.000000e-01 : f32
    %128 = vector.broadcast %cst_49 : f32 to vector<16x128xf32>
    %129 = arith.mulf %128, %127 : vector<16x128xf32>
    %130 = arith.mulf %117, %129 : vector<16x128xf32>
    %131 = arith.truncf %130 : vector<16x128xf32> to vector<16x128xbf16>
    %c0_50 = arith.constant 0 : index
    %c0_51 = arith.constant 0 : index
    %132 = vector.load %arg12[%c0_50, %c0_51] : memref<128x32xbf16, #tpu.memory_space<vmem>>, vector<128x32xbf16>
    %cst_52 = arith.constant dense<0.000000e+00> : vector<16x32xf32>
    %133 = tpu.matmul %131, %132, %cst_52 {dimension_numbers = #tpu.dot_dimension_numbers<[1], [0], [0], [1], [0, 0, 1, 1], [], []>} : vector<16x128xbf16>, vector<128x32xbf16>, vector<16x32xf32> -> vector<16x32xf32>
    %c0_53 = arith.constant 0 : index
    %c0_54 = arith.constant 0 : index
    %134 = vector.load %arg13[%c0_53, %c0_54] : memref<1x32xf32, #tpu.memory_space<vmem>>, vector<1x32xf32>
    %135 = vector.broadcast %134 : vector<1x32xf32> to vector<16x32xf32>
    %136 = arith.addf %133, %135 : vector<16x32xf32>
    %c0_55 = arith.constant 0 : index
    %c0_56 = arith.constant 0 : index
    %137 = vector.load %arg14[%c0_55, %c0_56] : memref<1x32xf32, #tpu.memory_space<vmem>>, vector<1x32xf32>
    %c0_57 = arith.constant 0 : index
    %c0_58 = arith.constant 0 : index
    %138 = vector.load %arg15[%c0_57, %c0_58] : memref<1x32xf32, #tpu.memory_space<vmem>>, vector<1x32xf32>
    %cst_59 = arith.constant dense<0.000000e+00> : vector<16xf32>
    %139 = vector.multi_reduction <add>, %136, %cst_59 [1] : vector<16x32xf32> to vector<16xf32>
    %140 = vector.shape_cast %139 : vector<16xf32> to vector<16x1xf32>
    %cst_60 = arith.constant 3.200000e+01 : f32
    %141 = vector.broadcast %cst_60 : f32 to vector<16x1xf32>
    %142 = arith.divf %140, %141 : vector<16x1xf32>
    %143 = vector.broadcast %142 : vector<16x1xf32> to vector<16x32xf32>
    %144 = arith.subf %136, %143 : vector<16x32xf32>
    %145 = arith.mulf %144, %144 : vector<16x32xf32>
    %cst_61 = arith.constant dense<0.000000e+00> : vector<16xf32>
    %146 = vector.multi_reduction <add>, %145, %cst_61 [1] : vector<16x32xf32> to vector<16xf32>
    %147 = vector.shape_cast %146 : vector<16xf32> to vector<16x1xf32>
    %cst_62 = arith.constant 3.200000e+01 : f32
    %148 = vector.broadcast %cst_62 : f32 to vector<16x1xf32>
    %149 = arith.divf %147, %148 : vector<16x1xf32>
    %150 = vector.broadcast %142 : vector<16x1xf32> to vector<16x32xf32>
    %151 = arith.subf %136, %150 : vector<16x32xf32>
    %cst_63 = arith.constant 9.99999974E-6 : f32
    %152 = vector.broadcast %cst_63 : f32 to vector<16x1xf32>
    %153 = arith.addf %149, %152 : vector<16x1xf32>
    %154 = math.rsqrt %153 : vector<16x1xf32>
    %155 = vector.broadcast %154 : vector<16x1xf32> to vector<16x32xf32>
    %156 = arith.mulf %151, %155 : vector<16x32xf32>
    %157 = vector.broadcast %137 : vector<1x32xf32> to vector<16x32xf32>
    %158 = arith.mulf %156, %157 : vector<16x32xf32>
    %159 = vector.broadcast %138 : vector<1x32xf32> to vector<16x32xf32>
    %160 = arith.addf %158, %159 : vector<16x32xf32>
    %161 = arith.addf %111, %160 : vector<16x32xf32>
    %c0_64 = arith.constant 0 : index
    %c0_65 = arith.constant 0 : index
    %c0_66 = arith.constant 0 : index
    %162 = vector.load %arg16[%c0_64, %c0_65, %c0_66] : memref<1x16x32xf32, #tpu.memory_space<vmem>>, vector<1x16x32xf32>
    %163 = vector.shape_cast %162 : vector<1x16x32xf32> to vector<16x32xf32>
    %164 = vector.shape_cast %161 : vector<16x32xf32> to vector<1x16x32xf32>
    tpu.vector_store %arg16[%c0_64, %c0_65, %c0_66], %164 {strides = array<i32>} : memref<1x16x32xf32, #tpu.memory_space<vmem>>, vector<1x16x32xf32>,
    return
  }
  func.func @transform_0(%arg0: i32, %arg1: i32) -> (i32, i32, i32) {
    %c0_i32 = arith.constant 0 : i32
    %c0_i32_0 = arith.constant 0 : i32
    return %arg0, %arg1, %c0_i32 : i32, i32, i32
  }
  func.func @transform_1(%arg0: i32, %arg1: i32) -> (i32, i32, i32) {
    %c0_i32 = arith.constant 0 : i32
    %c0_i32_0 = arith.constant 0 : i32
    %c0_i32_1 = arith.constant 0 : i32
    return %arg0, %c0_i32, %c0_i32_0 : i32, i32, i32
  }
  func.func @transform_2(%arg0: i32, %arg1: i32) -> (i32, i32) {
    %c0_i32 = arith.constant 0 : i32
    %c0_i32_0 = arith.constant 0 : i32
    %c0_i32_1 = arith.constant 0 : i32
    return %c0_i32, %c0_i32_0 : i32, i32
  }
  func.func @transform_3(%arg0: i32, %arg1: i32) -> (i32, i32) {
    %c0_i32 = arith.constant 0 : i32
    %c0_i32_0 = arith.constant 0 : i32
    %c0_i32_1 = arith.constant 0 : i32
    return %c0_i32, %c0_i32_0 : i32, i32
  }
  func.func @transform_4(%arg0: i32, %arg1: i32) -> (i32, i32) {
    %c0_i32 = arith.constant 0 : i32
    %c0_i32_0 = arith.constant 0 : i32
    %c0_i32_1 = arith.constant 0 : i32
    return %c0_i32, %c0_i32_0 : i32, i32
  }
  func.func @transform_5(%arg0: i32, %arg1: i32) -> (i32, i32) {
    %c0_i32 = arith.constant 0 : i32
    %c0_i32_0 = arith.constant 0 : i32
    %c0_i32_1 = arith.constant 0 : i32
    return %c0_i32, %c0_i32_0 : i32, i32
  }
  func.func @transform_6(%arg0: i32, %arg1: i32) -> (i32, i32) {
    %c0_i32 = arith.constant 0 : i32
    %c0_i32_0 = arith.constant 0 : i32
    %c0_i32_1 = arith.constant 0 : i32
    return %c0_i32, %c0_i32_0 : i32, i32
  }
  func.func @transform_7(%arg0: i32, %arg1: i32) -> (i32, i32) {
    %c0_i32 = arith.constant 0 : i32
    %c0_i32_0 = arith.constant 0 : i32
    %c0_i32_1 = arith.constant 0 : i32
    return %c0_i32, %c0_i32_0 : i32, i32
  }
  func.func @transform_8(%arg0: i32, %arg1: i32) -> (i32, i32) {
    %c0_i32 = arith.constant 0 : i32
    %c0_i32_0 = arith.constant 0 : i32
    %c0_i32_1 = arith.constant 0 : i32
    return %c0_i32, %c0_i32_0 : i32, i32
  }
  func.func @transform_9(%arg0: i32, %arg1: i32) -> (i32, i32) {
    %c0_i32 = arith.constant 0 : i32
    %c0_i32_0 = arith.constant 0 : i32
    %c0_i32_1 = arith.constant 0 : i32
    return %c0_i32, %c0_i32_0 : i32, i32
  }
  func.func @transform_10(%arg0: i32, %arg1: i32) -> (i32, i32) {
    %c0_i32 = arith.constant 0 : i32
    %c0_i32_0 = arith.constant 0 : i32
    %c0_i32_1 = arith.constant 0 : i32
    return %c0_i32, %c0_i32_0 : i32, i32
  }
  func.func @transform_11(%arg0: i32, %arg1: i32) -> (i32, i32) {
    %c0_i32 = arith.constant 0 : i32
    %c0_i32_0 = arith.constant 0 : i32
    %c0_i32_1 = arith.constant 0 : i32
    return %c0_i32, %c0_i32_0 : i32, i32
  }
  func.func @transform_12(%arg0: i32, %arg1: i32) -> (i32, i32) {
    %c0_i32 = arith.constant 0 : i32
    %c0_i32_0 = arith.constant 0 : i32
    %c0_i32_1 = arith.constant 0 : i32
    return %c0_i32, %c0_i32_0 : i32, i32
  }
  func.func @transform_13(%arg0: i32, %arg1: i32) -> (i32, i32) {
    %c0_i32 = arith.constant 0 : i32
    %c0_i32_0 = arith.constant 0 : i32
    %c0_i32_1 = arith.constant 0 : i32
    return %c0_i32, %c0_i32_0 : i32, i32
  }
  func.func @transform_14(%arg0: i32, %arg1: i32) -> (i32, i32, i32) {
    %c0_i32 = arith.constant 0 : i32
    %c0_i32_0 = arith.constant 0 : i32
    return %arg0, %arg1, %c0_i32 : i32, i32, i32
  }
}

</mosaic_0001>

<llo_original>
// kernel: tpu_custom_call.1
$region0: #{tpu_custom_call.1}
  #allocation0 [shape = 'u32[]', space=smem, size = 0x4, offset = 0x4, fixed_abs, tag = 'smem constant byte address 0x4 - core index']
  #allocation1 [shape = 'u32[72,128]{1,0:T(1,128)}', space=vmem, size = 0x9000, scoped, tag = 'internal scratch']
  %s0 = inlined_call_operand.vmem [shape: f32[2,16,32], index: 0, kind: input, shape index: {}]
  %s1 = inlined_call_operand.vmem [shape: bf16[2,16,32], index: 1, kind: input, shape index: {}]
  %s2 = inlined_call_operand.vmem [shape: bf16[32,32], index: 2, kind: input, shape index: {}]
  %s3 = inlined_call_operand.vmem [shape: bf16[32,64], index: 3, kind: input, shape index: {}]
  %s4 = inlined_call_operand.hbm [shape: bf16[32,32], index: 4, kind: input, shape index: {}]
  %s5 = inlined_call_operand.vmem [shape: f32[1,32], index: 5, kind: input, shape index: {}]
  %s6 = inlined_call_operand.vmem [shape: f32[1,32], index: 6, kind: input, shape index: {}]
  %s7 = inlined_call_operand.vmem [shape: f32[1,32], index: 7, kind: input, shape index: {}]
  %s8 = inlined_call_operand.hbm [shape: bf16[32,128], index: 8, kind: input, shape index: {}]
  %s9 = inlined_call_operand.vmem [shape: f32[1,128], index: 9, kind: input, shape index: {}]
  %s10 = inlined_call_operand.vmem [shape: bf16[128,32], index: 10, kind: input, shape index: {}]
  %s11 = inlined_call_operand.vmem [shape: f32[1,32], index: 11, kind: input, shape index: {}]
  %s12 = inlined_call_operand.vmem [shape: f32[1,32], index: 12, kind: input, shape index: {}]
  %s13 = inlined_call_operand.vmem [shape: f32[1,32], index: 13, kind: input, shape index: {}]
  %s14 = inlined_call_operand.hbm [shape: f32[2,16,32], index: 14, kind: output, shape index: {}]
  %s15 = sld [smem:[#allocation0]]
  $region97: #{tpu_custom_call.1} parent=0
    _
  %s17 = ssub.s32 1, %s15
  %s18 = scalar_select 0, %s17, %s15
  $region1: #{tpu_custom_call.1} parent=0
    #allocation2 [shape = 'u8[8192]{0}', space=vmem, size = 0x2000, scoped, tag = 'input window, operand 4, single buffered']
    #allocation3 [shape = 's32[2]{0}', space=sflag, size = 0x8, scoped, tag = 'scoped memory for tpu_custom_call.1']
    #allocation4 [shape = 's32[2]{0}', space=sflag, size = 0x8, scoped, tag = 'scoped memory for tpu_custom_call.1']
    #allocation5 [shape = 'u8[8192]{0}', space=vmem, size = 0x2000, scoped, tag = 'input window, operand 8, single buffered']
    #allocation6 [shape = 's32[1]{0}', space=sflag, size = 0x4, scoped, tag = 'scoped memory for tpu_custom_call.1']
    #allocation7 [shape = 'u8[16384]{0}', space=vmem, size = 0x4000, scoped, tag = 'output window, operand 0']
    %19 = vsyncpa [#allocation3], 0
    %20 = vsyncpa [#allocation6], 0
    %21 = vsyncpa [#allocation4], 0
    %s22 = scalar_lea.sflag [#allocation4], 1
    %23 = vsyncpa %s22, 0
    loop: start=0, step=1, limit=4
    $region2: #{tpu_custom_call.1} parent=1 // loop_pre_header
      _
    $region3: #{tpu_custom_call.1} parent=1 // loop_header
      %s25 = sphi 0, %s29
      %p26 = scmp.ge.s32.totalorder %s25, 4
      %s32 = sphi 0, %s44
      %s33 = sphi 0, %s40
      %s34 = sphi 0, %s32
      %s35 = sphi 0, %s33
      %s36 = sphi 0, %s34
      %s37 = sphi 0, %s35
      %s49 = sphi 0, %s51
      %s52 = sphi 0, %s49
      %s53 = sphi 0, %s52
      %s69 = sphi 0, %s53
      %s75 = sphi 0, %s77
      %s78 = sphi 0, %s75
      %s79 = sphi 0, %s78
      %s95 = sphi 0, %s79
      %s99 = sphi 0, %s99
      %s101 = sphi 0, %s99
      %s102 = sphi 0, %s101
      %s116 = sphi 0, %s102
      %s120 = sphi 0, %s120
      %s122 = sphi 0, %s120
      %s123 = sphi 0, %s122
      %s137 = sphi 0, %s123
      %s141 = sphi 0, %s141
      %s143 = sphi 0, %s141
      %s144 = sphi 0, %s143
      %s158 = sphi 0, %s144
      %s162 = sphi 0, %s162
      %s164 = sphi 0, %s162
      %s165 = sphi 0, %s164
      %s179 = sphi 0, %s165
      %s183 = sphi 0, %s183
      %s185 = sphi 0, %s183
      %s186 = sphi 0, %s185
      %s200 = sphi 0, %s186
      %s204 = sphi 0, %s204
      %s206 = sphi 0, %s204
      %s207 = sphi 0, %s206
      %s221 = sphi 0, %s207
      %s225 = sphi 0, %s225
      %s227 = sphi 0, %s225
      %s228 = sphi 0, %s227
      %s242 = sphi 0, %s228
      %s246 = sphi 0, %s246
      %s248 = sphi 0, %s246
      %s249 = sphi 0, %s248
      %s263 = sphi 0, %s249
      %s267 = sphi 0, %s267
      %s269 = sphi 0, %s267
      %s270 = sphi 0, %s269
      %s284 = sphi 0, %s270
      %s288 = sphi 0, %s288
      %s290 = sphi 0, %s288
      %s291 = sphi 0, %s290
      %s305 = sphi 0, %s291
      %s309 = sphi 0, %s309
      %s311 = sphi 0, %s309
      %s312 = sphi 0, %s311
      %s326 = sphi 0, %s312
      %s330 = sphi 0, %s330
      %s332 = sphi 0, %s330
      %s333 = sphi 0, %s332
      %s347 = sphi 0, %s333
      %s355 = sphi 0, %s357
      %s358 = sphi 0, %s355
      %s359 = sphi 0, %s358
      %s375 = sphi 0, %s359
    $region4: #{tpu_custom_call.1} parent=1 // loop_header_branch
      %28 = sbr.rel (%p26) target = $region8
    $region5: #{tpu_custom_call.1} parent=1 // loop_body
      %s30 = ssub.s32 %s25, 1
      %s31 = ssub.s32 %s25, 2
      %s38 = sadd.s32 1, %s33
      %p39 = scmp.ge.s32.totalorder %s38, 1
      %s40 = scalar_select %p39, 0, %s38
      %s41 = sadd.s32 1, %s32
      %s42 = scalar_select %p39, %s41, %s32
      %p43 = scmp.ge.s32.totalorder %s42, 2
      %s44 = scalar_select %p43, 0, %s42
      %s45 = ssub.s32 %s32, %s44
      %s46 = ssub.s32 %s33, %s40
      %s47 = sor.u32 %s45, %s46
      %p48 = scmp.eq.s32.totalorder %s47, 0
      %s50 = sadd.s32 %s49, 1
      %s51 = scalar_select %p48, %s49, %s50
      %p54 = pneg %p48
      %p55 = scmp.eq.s32.totalorder %s25, 1
      %p56 = por %p54, %p55
      %p57 = scmp.ne.s32.totalorder %s49, %s52
      %p58 = scmp.eq.s32.totalorder %s25, 0
      %p59 = por %p57, %p58
      %p60 = scmp.ne.s32.totalorder %s49, %s52
      %p61 = scmp.eq.s32.totalorder %s30, 1
      %p62 = por %p60, %p61
      %p63 = scmp.ne.s32.totalorder %s52, %s53
      %p64 = scmp.eq.s32.totalorder %s30, 0
      %p65 = por %p63, %p64
      %p66 = scmp.ne.s32.totalorder %s52, %s53
      %p67 = scmp.eq.s32.totalorder %s31, 1
      %p68 = por %p66, %p67
      %p70 = scmp.ne.s32.totalorder %s53, %s69
      %p71 = scmp.eq.s32.totalorder %s31, 0
      %p72 = por %p70, %p71
      %s73 = ssub.s32 %s32, %s44
      %p74 = scmp.eq.s32.totalorder %s73, 0
      %s76 = sadd.s32 %s75, 1
      %s77 = scalar_select %p74, %s75, %s76
      %p80 = pneg %p74
      %p81 = scmp.eq.s32.totalorder %s25, 1
      %p82 = por %p80, %p81
      %p83 = scmp.ne.s32.totalorder %s75, %s78
      %p84 = scmp.eq.s32.totalorder %s25, 0
      %p85 = por %p83, %p84
      %p86 = scmp.ne.s32.totalorder %s75, %s78
      %p87 = scmp.eq.s32.totalorder %s30, 1
      %p88 = por %p86, %p87
      %p89 = scmp.ne.s32.totalorder %s78, %s79
      %p90 = scmp.eq.s32.totalorder %s30, 0
      %p91 = por %p89, %p90
      %p92 = scmp.ne.s32.totalorder %s78, %s79
      %p93 = scmp.eq.s32.totalorder %s31, 1
      %p94 = por %p92, %p93
      %p96 = scmp.ne.s32.totalorder %s79, %s95
      %p97 = scmp.eq.s32.totalorder %s31, 0
      %p98 = por %p96, %p97
      %s100 = sadd.s32 %s99, 1
      %p103 = scmp.eq.s32.totalorder %s25, 1
      %p104 = scmp.ne.s32.totalorder %s99, %s101
      %p105 = scmp.eq.s32.totalorder %s25, 0
      %p106 = por %p104, %p105
      %p107 = scmp.ne.s32.totalorder %s99, %s101
      %p108 = scmp.eq.s32.totalorder %s30, 1
      %p109 = por %p107, %p108
      %p110 = scmp.ne.s32.totalorder %s101, %s102
      %p111 = scmp.eq.s32.totalorder %s30, 0
      %p112 = por %p110, %p111
      %p113 = scmp.ne.s32.totalorder %s101, %s102
      %p114 = scmp.eq.s32.totalorder %s31, 1
      %p115 = por %p113, %p114
      %p117 = scmp.ne.s32.totalorder %s102, %s116
      %p118 = scmp.eq.s32.totalorder %s31, 0
      %p119 = por %p117, %p118
      %s121 = sadd.s32 %s120, 1
      %p124 = scmp.eq.s32.totalorder %s25, 1
      %p125 = scmp.ne.s32.totalorder %s120, %s122
      %p126 = scmp.eq.s32.totalorder %s25, 0
      %p127 = por %p125, %p126
      %p128 = scmp.ne.s32.totalorder %s120, %s122
      %p129 = scmp.eq.s32.totalorder %s30, 1
      %p130 = por %p128, %p129
      %p131 = scmp.ne.s32.totalorder %s122, %s123
      %p132 = scmp.eq.s32.totalorder %s30, 0
      %p133 = por %p131, %p132
      %p134 = scmp.ne.s32.totalorder %s122, %s123
      %p135 = scmp.eq.s32.totalorder %s31, 1
      %p136 = por %p134, %p135
      %p138 = scmp.ne.s32.totalorder %s123, %s137
      %p139 = scmp.eq.s32.totalorder %s31, 0
      %p140 = por %p138, %p139
      %s142 = sadd.s32 %s141, 1
      %p145 = scmp.eq.s32.totalorder %s25, 1
      %p146 = scmp.ne.s32.totalorder %s141, %s143
      %p147 = scmp.eq.s32.totalorder %s25, 0
      %p148 = por %p146, %p147
      %p149 = scmp.ne.s32.totalorder %s141, %s143
      %p150 = scmp.eq.s32.totalorder %s30, 1
      %p151 = por %p149, %p150
      %p152 = scmp.ne.s32.totalorder %s143, %s144
      %p153 = scmp.eq.s32.totalorder %s30, 0
      %p154 = por %p152, %p153
      %p155 = scmp.ne.s32.totalorder %s143, %s144
      %p156 = scmp.eq.s32.totalorder %s31, 1
      %p157 = por %p155, %p156
      %p159 = scmp.ne.s32.totalorder %s144, %s158
      %p160 = scmp.eq.s32.totalorder %s31, 0
      %p161 = por %p159, %p160
      %s163 = sadd.s32 %s162, 1
      %p166 = scmp.eq.s32.totalorder %s25, 1
      %p167 = scmp.ne.s32.totalorder %s162, %s164
      %p168 = scmp.eq.s32.totalorder %s25, 0
      %p169 = por %p167, %p168
      %p170 = scmp.ne.s32.totalorder %s162, %s164
      %p171 = scmp.eq.s32.totalorder %s30, 1
      %p172 = por %p170, %p171
      %p173 = scmp.ne.s32.totalorder %s164, %s165
      %p174 = scmp.eq.s32.totalorder %s30, 0
      %p175 = por %p173, %p174
      %p176 = scmp.ne.s32.totalorder %s164, %s165
      %p177 = scmp.eq.s32.totalorder %s31, 1
      %p178 = por %p176, %p177
      %p180 = scmp.ne.s32.totalorder %s165, %s179
      %p181 = scmp.eq.s32.totalorder %s31, 0
      %p182 = por %p180, %p181
      %s184 = sadd.s32 %s183, 1
      %p187 = scmp.eq.s32.totalorder %s25, 1
      %p188 = scmp.ne.s32.totalorder %s183, %s185
      %p189 = scmp.eq.s32.totalorder %s25, 0
      %p190 = por %p188, %p189
      %p191 = scmp.ne.s32.totalorder %s183, %s185
      %p192 = scmp.eq.s32.totalorder %s30, 1
      %p193 = por %p191, %p192
      %p194 = scmp.ne.s32.totalorder %s185, %s186
      %p195 = scmp.eq.s32.totalorder %s30, 0
      %p196 = por %p194, %p195
      %p197 = scmp.ne.s32.totalorder %s185, %s186
      %p198 = scmp.eq.s32.totalorder %s31, 1
      %p199 = por %p197, %p198
      %p201 = scmp.ne.s32.totalorder %s186, %s200
      %p202 = scmp.eq.s32.totalorder %s31, 0
      %p203 = por %p201, %p202
      %s205 = sadd.s32 %s204, 1
      %p208 = scmp.eq.s32.totalorder %s25, 1
      %p209 = scmp.ne.s32.totalorder %s204, %s206
      %p210 = scmp.eq.s32.totalorder %s25, 0
      %p211 = por %p209, %p210
      %p212 = scmp.ne.s32.totalorder %s204, %s206
      %p213 = scmp.eq.s32.totalorder %s30, 1
      %p214 = por %p212, %p213
      %p215 = scmp.ne.s32.totalorder %s206, %s207
      %p216 = scmp.eq.s32.totalorder %s30, 0
      %p217 = por %p215, %p216
      %p218 = scmp.ne.s32.totalorder %s206, %s207
      %p219 = scmp.eq.s32.totalorder %s31, 1
      %p220 = por %p218, %p219
      %p222 = scmp.ne.s32.totalorder %s207, %s221
      %p223 = scmp.eq.s32.totalorder %s31, 0
      %p224 = por %p222, %p223
      %s226 = sadd.s32 %s225, 1
      %p229 = scmp.eq.s32.totalorder %s25, 1
      %p230 = scmp.ne.s32.totalorder %s225, %s227
      %p231 = scmp.eq.s32.totalorder %s25, 0
      %p232 = por %p230, %p231
      %p233 = scmp.ne.s32.totalorder %s225, %s227
      %p234 = scmp.eq.s32.totalorder %s30, 1
      %p235 = por %p233, %p234
      %p236 = scmp.ne.s32.totalorder %s227, %s228
      %p237 = scmp.eq.s32.totalorder %s30, 0
      %p238 = por %p236, %p237
      %p239 = scmp.ne.s32.totalorder %s227, %s228
      %p240 = scmp.eq.s32.totalorder %s31, 1
      %p241 = por %p239, %p240
      %p243 = scmp.ne.s32.totalorder %s228, %s242
      %p244 = scmp.eq.s32.totalorder %s31, 0
      %p245 = por %p243, %p244
      %s247 = sadd.s32 %s246, 1
      %p250 = scmp.eq.s32.totalorder %s25, 1
      %p251 = scmp.ne.s32.totalorder %s246, %s248
      %p252 = scmp.eq.s32.totalorder %s25, 0
      %p253 = por %p251, %p252
      %p254 = scmp.ne.s32.totalorder %s246, %s248
      %p255 = scmp.eq.s32.totalorder %s30, 1
      %p256 = por %p254, %p255
      %p257 = scmp.ne.s32.totalorder %s248, %s249
      %p258 = scmp.eq.s32.totalorder %s30, 0
      %p259 = por %p257, %p258
      %p260 = scmp.ne.s32.totalorder %s248, %s249
      %p261 = scmp.eq.s32.totalorder %s31, 1
      %p262 = por %p260, %p261
      %p264 = scmp.ne.s32.totalorder %s249, %s263
      %p265 = scmp.eq.s32.totalorder %s31, 0
      %p266 = por %p264, %p265
      %s268 = sadd.s32 %s267, 1
      %p271 = scmp.eq.s32.totalorder %s25, 1
      %p272 = scmp.ne.s32.totalorder %s267, %s269
      %p273 = scmp.eq.s32.totalorder %s25, 0
      %p274 = por %p272, %p273
      %p275 = scmp.ne.s32.totalorder %s267, %s269
      %p276 = scmp.eq.s32.totalorder %s30, 1
      %p277 = por %p275, %p276
      %p278 = scmp.ne.s32.totalorder %s269, %s270
      %p279 = scmp.eq.s32.totalorder %s30, 0
      %p280 = por %p278, %p279
      %p281 = scmp.ne.s32.totalorder %s269, %s270
      %p282 = scmp.eq.s32.totalorder %s31, 1
      %p283 = por %p281, %p282
      %p285 = scmp.ne.s32.totalorder %s270, %s284
      %p286 = scmp.eq.s32.totalorder %s31, 0
      %p287 = por %p285, %p286
      %s289 = sadd.s32 %s288, 1
      %p292 = scmp.eq.s32.totalorder %s25, 1
      %p293 = scmp.ne.s32.totalorder %s288, %s290
      %p294 = scmp.eq.s32.totalorder %s25, 0
      %p295 = por %p293, %p294
      %p296 = scmp.ne.s32.totalorder %s288, %s290
      %p297 = scmp.eq.s32.totalorder %s30, 1
      %p298 = por %p296, %p297
      %p299 = scmp.ne.s32.totalorder %s290, %s291
      %p300 = scmp.eq.s32.totalorder %s30, 0
      %p301 = por %p299, %p300
      %p302 = scmp.ne.s32.totalorder %s290, %s291
      %p303 = scmp.eq.s32.totalorder %s31, 1
      %p304 = por %p302, %p303
      %p306 = scmp.ne.s32.totalorder %s291, %s305
      %p307 = scmp.eq.s32.totalorder %s31, 0
      %p308 = por %p306, %p307
      %s310 = sadd.s32 %s309, 1
      %p313 = scmp.eq.s32.totalorder %s25, 1
      %p314 = scmp.ne.s32.totalorder %s309, %s311
      %p315 = scmp.eq.s32.totalorder %s25, 0
      %p316 = por %p314, %p315
      %p317 = scmp.ne.s32.totalorder %s309, %s311
      %p318 = scmp.eq.s32.totalorder %s30, 1
      %p319 = por %p317, %p318
      %p320 = scmp.ne.s32.totalorder %s311, %s312
      %p321 = scmp.eq.s32.totalorder %s30, 0
      %p322 = por %p320, %p321
      %p323 = scmp.ne.s32.totalorder %s311, %s312
      %p324 = scmp.eq.s32.totalorder %s31, 1
      %p325 = por %p323, %p324
      %p327 = scmp.ne.s32.totalorder %s312, %s326
      %p328 = scmp.eq.s32.totalorder %s31, 0
      %p329 = por %p327, %p328
      %s331 = sadd.s32 %s330, 1
      %p334 = scmp.eq.s32.totalorder %s25, 1
      %p335 = scmp.ne.s32.totalorder %s330, %s332
      %p336 = scmp.eq.s32.totalorder %s25, 0
      %p337 = por %p335, %p336
      %p338 = scmp.ne.s32.totalorder %s330, %s332
      %p339 = scmp.eq.s32.totalorder %s30, 1
      %p340 = por %p338, %p339
      %p341 = scmp.ne.s32.totalorder %s332, %s333
      %p342 = scmp.eq.s32.totalorder %s30, 0
      %p343 = por %p341, %p342
      %p344 = scmp.ne.s32.totalorder %s332, %s333
      %p345 = scmp.eq.s32.totalorder %s31, 1
      %p346 = por %p344, %p345
      %p348 = scmp.ne.s32.totalorder %s333, %s347
      %p349 = scmp.eq.s32.totalorder %s31, 0
      %p350 = por %p348, %p349
      %s351 = ssub.s32 %s32, %s44
      %s352 = ssub.s32 %s33, %s40
      %s353 = sor.u32 %s351, %s352
      %p354 = scmp.eq.s32.totalorder %s353, 0
      %s356 = sadd.s32 %s355, 1
      %s357 = scalar_select %p354, %s355, %s356
      %p360 = pneg %p354
      %p361 = scmp.eq.s32.totalorder %s25, 1
      %p362 = por %p360, %p361
      %p363 = scmp.ne.s32.totalorder %s355, %s358
      %p364 = scmp.eq.s32.totalorder %s25, 0
      %p365 = por %p363, %p364
      %p366 = scmp.ne.s32.totalorder %s355, %s358
      %p367 = scmp.eq.s32.totalorder %s30, 1
      %p368 = por %p366, %p367
      %p369 = scmp.ne.s32.totalorder %s358, %s359
      %p370 = scmp.eq.s32.totalorder %s30, 0
      %p371 = por %p369, %p370
      %p372 = scmp.ne.s32.totalorder %s358, %s359
      %p373 = scmp.eq.s32.totalorder %s31, 1
      %p374 = por %p372, %p373
      %p376 = scmp.ne.s32.totalorder %s359, %s375
      %p377 = scmp.eq.s32.totalorder %s31, 0
      %p378 = por %p376, %p377
      %p379 = scmp.le.s32.totalorder 1, %s25
      %p380 = scmp.lt.s32.totalorder %s25, 3
      %p381 = pnand %p379, %p380
      %p382 = pneg %p381
      // Predicated region
      $region9: #{tpu_custom_call.1} parent=5 // pred_check
        _
      $region10: #{tpu_custom_call.1} parent=5 // pred_check_branch
        %384 = sbr.rel (%p381) target = $region12
      $region11: #{tpu_custom_call.1} parent=5 // pred_region
        %s385 = ssub.s32 %s25, 1
        // Predicated region
        $region13: #{tpu_custom_call.1} parent=11 // pred_check
          %p386 = pneg %p112
        $region14: #{tpu_custom_call.1} parent=11 // pred_check_branch
          %388 = sbr.rel (%p386) target = $region16
        $region15: #{tpu_custom_call.1} parent=11 // pred_region
          _
        $region16: #{tpu_custom_call.1} parent=11 // pred_fallthru
          _
        // Predicated region
        $region17: #{tpu_custom_call.1} parent=11 // pred_check
          %p389 = pneg %p133
        $region18: #{tpu_custom_call.1} parent=11 // pred_check_branch
          %391 = sbr.rel (%p389) target = $region20
        $region19: #{tpu_custom_call.1} parent=11 // pred_region
          _
        $region20: #{tpu_custom_call.1} parent=11 // pred_fallthru
          _
        // Predicated region
        $region21: #{tpu_custom_call.1} parent=11 // pred_check
          %p392 = pneg %p154
        $region22: #{tpu_custom_call.1} parent=11 // pred_check_branch
          %394 = sbr.rel (%p392) target = $region24
        $region23: #{tpu_custom_call.1} parent=11 // pred_region
          %396 = vsyncadd [#allocation3], 0
          %s397 = sshll.u32 %s4, 4
          %s398 = int_to_ptr.hbm [resolvable:$true] %s397
          %s399 = sshll.u32 [#allocation2], 4
          %s400 = int_to_ptr.vmem [resolvable:$true] %s399
          %405 = dma.hbm_to_vmem [thread:$0]  %s398, 256, %s400, [#allocation3], 64, 64, 4
        $region24: #{tpu_custom_call.1} parent=11 // pred_fallthru
          _
        // Predicated region
        $region25: #{tpu_custom_call.1} parent=11 // pred_check
          %p406 = pneg %p175
        $region26: #{tpu_custom_call.1} parent=11 // pred_check_branch
          %408 = sbr.rel (%p406) target = $region28
        $region27: #{tpu_custom_call.1} parent=11 // pred_region
          _
        $region28: #{tpu_custom_call.1} parent=11 // pred_fallthru
          _
        // Predicated region
        $region29: #{tpu_custom_call.1} parent=11 // pred_check
          %p409 = pneg %p196
        $region30: #{tpu_custom_call.1} parent=11 // pred_check_branch
          %411 = sbr.rel (%p409) target = $region32
        $region31: #{tpu_custom_call.1} parent=11 // pred_region
          _
        $region32: #{tpu_custom_call.1} parent=11 // pred_fallthru
          _
        // Predicated region
        $region33: #{tpu_custom_call.1} parent=11 // pred_check
          %p412 = pneg %p217
        $region34: #{tpu_custom_call.1} parent=11 // pred_check_branch
          %414 = sbr.rel (%p412) target = $region36
        $region35: #{tpu_custom_call.1} parent=11 // pred_region
          _
        $region36: #{tpu_custom_call.1} parent=11 // pred_fallthru
          _
        // Predicated region
        $region37: #{tpu_custom_call.1} parent=11 // pred_check
          %p415 = pneg %p238
        $region38: #{tpu_custom_call.1} parent=11 // pred_check_branch
          %417 = sbr.rel (%p415) target = $region40
        $region39: #{tpu_custom_call.1} parent=11 // pred_region
          %419 = vsyncadd [#allocation6], 0
          %s420 = sshll.u32 %s8, 4
          %s421 = int_to_ptr.hbm [resolvable:$true] %s420
          %s422 = sshll.u32 [#allocation5], 4
          %s423 = int_to_ptr.vmem [resolvable:$true] %s422
          %428 = dma.hbm_to_vmem [thread:$0]  %s421, 256, %s423, [#allocation6], 64, 64, 4
        $region40: #{tpu_custom_call.1} parent=11 // pred_fallthru
          _
        // Predicated region
        $region41: #{tpu_custom_call.1} parent=11 // pred_check
          %p429 = pneg %p259
        $region42: #{tpu_custom_call.1} parent=11 // pred_check_branch
          %431 = sbr.rel (%p429) target = $region44
        $region43: #{tpu_custom_call.1} parent=11 // pred_region
          _
        $region44: #{tpu_custom_call.1} parent=11 // pred_fallthru
          _
        // Predicated region
        $region45: #{tpu_custom_call.1} parent=11 // pred_check
          %p432 = pneg %p280
        $region46: #{tpu_custom_call.1} parent=11 // pred_check_branch
          %434 = sbr.rel (%p432) target = $region48
        $region47: #{tpu_custom_call.1} parent=11 // pred_region
          _
        $region48: #{tpu_custom_call.1} parent=11 // pred_fallthru
          _
        // Predicated region
        $region49: #{tpu_custom_call.1} parent=11 // pred_check
          %p435 = pneg %p301
        $region50: #{tpu_custom_call.1} parent=11 // pred_check_branch
          %437 = sbr.rel (%p435) target = $region52
        $region51: #{tpu_custom_call.1} parent=11 // pred_region
          _
        $region52: #{tpu_custom_call.1} parent=11 // pred_fallthru
          _
        // Predicated region
        $region53: #{tpu_custom_call.1} parent=11 // pred_check
          %p438 = pneg %p322
        $region54: #{tpu_custom_call.1} parent=11 // pred_check_branch
          %440 = sbr.rel (%p438) target = $region56
        $region55: #{tpu_custom_call.1} parent=11 // pred_region
          _
        $region56: #{tpu_custom_call.1} parent=11 // pred_fallthru
          _
        // Predicated region
        $region57: #{tpu_custom_call.1} parent=11 // pred_check
          %p441 = pneg %p343
        $region58: #{tpu_custom_call.1} parent=11 // pred_check_branch
          %443 = sbr.rel (%p441) target = $region60
        $region59: #{tpu_custom_call.1} parent=11 // pred_region
          _
        $region60: #{tpu_custom_call.1} parent=11 // pred_fallthru
          _
      $region12: #{tpu_custom_call.1} parent=5 // pred_fallthru
        _
      %p444 = scmp.lt.s32.totalorder %s25, 2
      // Predicated region
      $region61: #{tpu_custom_call.1} parent=5 // pred_check
        %p445 = pneg %p444
      $region62: #{tpu_custom_call.1} parent=5 // pred_check_branch
        %447 = sbr.rel (%p445) target = $region64
      $region63: #{tpu_custom_call.1} parent=5 // pred_region
        // Predicated region
        $region65: #{tpu_custom_call.1} parent=63 // pred_check
          %p448 = pneg %p59
        $region66: #{tpu_custom_call.1} parent=63 // pred_check_branch
          %450 = sbr.rel (%p448) target = $region68
        $region67: #{tpu_custom_call.1} parent=63 // pred_region
          %s451 = smul.u32 2, %s33
          %p452 = scmp.lt.s32.totalorder %s32, 1
          %s453 = scalar_select %p452, %s32, 1
          %p454 = scmp.lt.s32.totalorder %s451, 1
          %s455 = scalar_select %p454, %s451, 1
          %s456 = smul.addr %s453, 2
          %s457 = sadd.s32 %s455, %s456
          %s458 = smul.addr %s457, 8
          %s459 = scalar_lea.vmem %s0, %s458
          %s460 = smul.u32 2, %s33
        $region68: #{tpu_custom_call.1} parent=63 // pred_fallthru
          _
        // Predicated region
        $region69: #{tpu_custom_call.1} parent=63 // pred_check
          %p461 = pneg %p85
        $region70: #{tpu_custom_call.1} parent=63 // pred_check_branch
          %463 = sbr.rel (%p461) target = $region72
        $region71: #{tpu_custom_call.1} parent=63 // pred_region
          %p464 = scmp.lt.s32.totalorder %s32, 1
          %s465 = scalar_select %p464, %s32, 1
          %s466 = smul.addr %s465, 2
          %s467 = smul.addr %s466, 4
          %s468 = scalar_lea.vmem %s1, %s467
        $region72: #{tpu_custom_call.1} parent=63 // pred_fallthru
          _
      $region64: #{tpu_custom_call.1} parent=5 // pred_fallthru
        _
      %p469 = scmp.le.s32.totalorder 1, %s25
      %p470 = scmp.lt.s32.totalorder %s25, 3
      %p471 = pnand %p469, %p470
      %p472 = pneg %p471
      // Predicated region
      $region73: #{tpu_custom_call.1} parent=5 // pred_check
        _
      $region74: #{tpu_custom_call.1} parent=5 // pred_check_branch
        %474 = sbr.rel (%p471) target = $region76
      $region75: #{tpu_custom_call.1} parent=5 // pred_region
        %s475 = ssub.s32 %s25, 1
        // Predicated region
        $region77: #{tpu_custom_call.1} parent=75 // pred_check
          %p476 = pneg %p154
        $region78: #{tpu_custom_call.1} parent=75 // pred_check_branch
          %478 = sbr.rel (%p476) target = $region80
        $region79: #{tpu_custom_call.1} parent=75 // pred_region
          %480 = dma.done [#allocation3], 256
        $region80: #{tpu_custom_call.1} parent=75 // pred_fallthru
          _
        // Predicated region
        $region81: #{tpu_custom_call.1} parent=75 // pred_check
          %p481 = pneg %p238
        $region82: #{tpu_custom_call.1} parent=75 // pred_check_branch
          %483 = sbr.rel (%p481) target = $region84
        $region83: #{tpu_custom_call.1} parent=75 // pred_region
          %485 = dma.done [#allocation6], 256
        $region84: #{tpu_custom_call.1} parent=75 // pred_fallthru
          _
        %s486 = smul.u32 2, %s35
        %p487 = scmp.lt.s32.totalorder %s34, 1
        %s488 = scalar_select %p487, %s34, 1
        %p489 = scmp.lt.s32.totalorder %s486, 1
        %s490 = scalar_select %p489, %s486, 1
        %s491 = smul.addr %s488, 2
        %s492 = sadd.s32 %s490, %s491
        %s493 = smul.addr %s492, 8
        %s494 = scalar_lea.vmem %s0, %s493
        %p495 = pneg %p65
        %p496 = pneg %p62
        %p497 = scmp.lt.s32.totalorder %s34, 1
        %s498 = scalar_select %p497, %s34, 1
        %s499 = smul.addr %s498, 2
        %s500 = smul.addr %s499, 4
        %s501 = scalar_lea.vmem %s1, %s500
        %p502 = pneg %p91
        %p503 = pneg %p88
        %p504 = pneg %p112
        %p505 = pneg %p109
        %p506 = pneg %p133
        %p507 = pneg %p130
        %p508 = pneg %p154
        %p509 = pneg %p151
        %p510 = pneg %p175
        %p511 = pneg %p172
        %p512 = pneg %p196
        %p513 = pneg %p193
        %p514 = pneg %p217
        %p515 = pneg %p214
        %p516 = pneg %p238
        %p517 = pneg %p235
        %p518 = pneg %p259
        %p519 = pneg %p256
        %p520 = pneg %p280
        %p521 = pneg %p277
        %p522 = pneg %p301
        %p523 = pneg %p298
        %p524 = pneg %p322
        %p525 = pneg %p319
        %p526 = pneg %p343
        %p527 = pneg %p340
        %p528 = pneg %p371
        %p529 = pneg %p368
        %s530 = sand.u32 %s358, 1
        %s531 = scalar_lea.sflag [#allocation4], %s530
        %s532 = sand.u32 %s358, 1
        %s533 = smul.addr %s532, 16
        %s534 = scalar_lea.vmem [#allocation7], %s533
        %s535 = smul.u32 2, %s35
        %p536 = scmp.lt.s32.totalorder %s34, 1
        %s537 = scalar_select %p536, %s34, 1
        %p538 = scmp.lt.s32.totalorder %s535, 1
        %s539 = scalar_select %p538, %s535, 1
        %s540 = smul.addr %s537, 2
        %s541 = sadd.s32 %s539, %s540
        %s542 = smul.addr %s541, 8
        %s543 = scalar_lea.vmem %s0, %s542
        %s544 = smul.u32 2, %s35
        %p545 = scmp.lt.s32.totalorder %s34, 1
        %s546 = scalar_select %p545, %s34, 1
        %s547 = smul.addr %s546, 2
        %s548 = smul.addr %s547, 4
        %s549 = scalar_lea.vmem %s1, %s548
        %s550 = smul.u32 2, %s35
        %v552 = vld [vmem:[%s543] sm:$0xff]
        %v553 = vld [vmem:[%s543 + $0x8] sm:$0xff]
        %v554 = vpack.c.bf16 %v553, %v552
        %v555 = vld [vmem:[%s549] sm:$0xf]
        %v556 = vld [vmem:[%s549 + $0x4] sm:$0xf]
        %v557 = vld [vmem:[%s2] sm:$0xf]
        %v558 = vld [vmem:[%s2 + $0x4] sm:$0xf]
        %v559 = vld [vmem:[%s2 + $0x8] sm:$0xf]
        %v560 = vld [vmem:[%s2 + $0xc] sm:$0xf]
        %v565 = vunpack.c.l.b16 %v557
        %v566 = vunpack.c.l.b16 %v558
        %v567 = vunpack.c.l.b16 %v559
        %v568 = vunpack.c.l.b16 %v560
        %v569 = vpack.c.b16 %v566, %v565
        %v570 = vpack.c.b16 %v568, %v567
        %vm573 = vcmask 261120
        %v575 = vsel %vm573, %v554, 0
        %577 = vmatpush.bf16.msra.mxu0 0
        %578 = vmatpush.bf16.msra.mxu0 0
        %579 = vmatpush.bf16.msra.mxu0 0
        %580 = vmatpush.bf16.msra.mxu0 0
        %581 = vmatpush.bf16.msra.mxu0 0
        %582 = vmatpush.bf16.msra.mxu0 0
        %583 = vmatpush.bf16.msra.mxu0 %v570
        %584 = vmatpush.bf16.msra.mxu0 %v569
        %585 = vmatmul.bf16.gmra.mxu0 %v575
        %v586 = vpop.f32.mrf.mxu0
        %v587 = vadd.f32 0.0, %v586
        %v588 = vpop.f32.mrf.mxu0
        %v589 = vadd.f32 0.0, %v588
        %590 = vdwg.mxu0
        %v591 = vld [vmem:[%s3] sm:$0xf]
        %v592 = vld [vmem:[%s3 + $0x4] sm:$0xf]
        %v593 = vld [vmem:[%s3 + $0x8] sm:$0xf]
        %v594 = vld [vmem:[%s3 + $0xc] sm:$0xf]
        %v597 = vunpack.c.l.b16 %v555
        %v598 = vunpack.c.l.b16 %v556
        %v599 = vpack.c.b16 %v598, %v597
        %v604 = vunpack.c.l.b16 %v591
        %v605 = vunpack.c.l.b16 %v592
        %v606 = vunpack.c.l.b16 %v593
        %v607 = vunpack.c.l.b16 %v594
        %v608 = vpack.c.b16 %v605, %v604
        %v609 = vpack.c.b16 %v607, %v606
        %v613 = vsel %vm573, %v599, 0
        %615 = vmatpush.bf16.msra.mxu0 0
        %616 = vmatpush.bf16.msra.mxu0 0
        %617 = vmatpush.bf16.msra.mxu0 0
        %618 = vmatpush.bf16.msra.mxu0 0
        %619 = vmatpush.bf16.msra.mxu0 0
        %620 = vmatpush.bf16.msra.mxu0 0
        %621 = vmatpush.bf16.msra.mxu0 %v609
        %622 = vmatpush.bf16.msra.mxu0 %v608
        %623 = vmatmul.bf16.gmra.mxu0 %v613
        %v624 = vpop.f32.mrf.mxu0
        %v625 = vadd.f32 0.0, %v624
        %v626 = vpop.f32.mrf.mxu0
        %v627 = vadd.f32 0.0, %v626
        %628 = vdwg.mxu0
        %v629 = vmul.f32 %v587, 0.35355338
        %v630 = vmul.f32 %v589, 0.35355338
        %v631 = vpack.c.bf16 %v629, %v629
        %v632 = vpack.c.bf16 %v630, %v630
        %v633 = vpack.c.bf16 %v625, %v625
        %v634 = vpack.c.bf16 %v627, %v627
        %v637 = vunpack.c.l.b16 %v631
        %v638 = vunpack.c.l.b16 %v632
        %v639 = vpack.c.b16 %v638, %v637
        %v642 = vunpack.c.l.b16 %v633
        %v643 = vunpack.c.l.b16 %v634
        %v644 = vpack.c.b16 %v643, %v642
        %vm645 = vcmask 64512
        %v647 = vsel %vm645, %v639, 0
        %v650 = vsel %vm645, %v644, 0
        %652 = vmatpush.bf16.xpose.msra.mxu0 0
        %653 = vmatpush.bf16.xpose.msra.mxu0 0
        %654 = vmatpush.bf16.xpose.msra.mxu0 0
        %655 = vmatpush.bf16.xpose.msra.mxu0 0
        %656 = vmatpush.bf16.xpose.msra.mxu0 0
        %657 = vmatpush.bf16.xpose.msra.mxu0 0
        %658 = vmatpush.bf16.xpose.msra.mxu0 0
        %659 = vmatpush.bf16.xpose.msra.mxu0 %v650
        %660 = vmatmul.bf16.gmra.mxu0 %v647
        %v661 = vpop.f32.mrf.mxu0
        %v662 = vadd.f32 0.0, %v661
        %v663 = vpop.f32.mrf.mxu0
        %v664 = vadd.f32 0.0, %v663
        %665 = vdwg.mxu0
        %vm666 = vcmask 130048
        %v667 = vsel %vm666, %v662, -inf
        %668 = vmax.xlane.f32.xlu0 %v667
        %v669 = vpop.xlane.xlu0 %668
        %v670 = vsel %vm666, %v664, -inf
        %671 = vmax.xlane.f32.xlu0 %v670
        %v672 = vpop.xlane.xlu0 %671
        %v673 = vsub.f32 %v662, %v669
        %v674 = vsub.f32 %v664, %v672
        %v675 = vmul.f32 %v673, 1.442695
        %v676 = vpow.pop %v675
        %v677 = vmul.f32 %v674, 1.442695
        %v678 = vpow.pop %v677
        %v679 = vsel %vm666, %v676, 0.0
        %680 = vadd.xlane.f32.xlu0 %v679
        %v681 = vpop.xlane.xlu0 %680
        %v682 = vsel %vm666, %v678, 0.0
        %683 = vadd.xlane.f32.xlu0 %v682
        %v684 = vpop.xlane.xlu0 %683
        %v685 = vrcp.pop %v681
        %v686 = vrcp.pop %v684
        %v687 = vmul.f32 %v676, %v685
        %v688 = vmul.f32 %v678, %v686
        %v689 = vpack.c.bf16 %v688, %v687
        %690 = vrot.lane.b32.xlu0 %v644, 96
        %v691 = vpop.permute.xlu0 %690
        %v694 = vsel %vm666, %v689, 0
        %696 = vmatpush.bf16.msra.mxu0 0
        %697 = vmatpush.bf16.msra.mxu0 0
        %698 = vmatpush.bf16.msra.mxu0 0
        %699 = vmatpush.bf16.msra.mxu0 0
        %700 = vmatpush.bf16.msra.mxu0 0
        %701 = vmatpush.bf16.msra.mxu0 0
        %702 = vmatpush.bf16.msra.mxu0 0
        %703 = vmatpush.bf16.msra.mxu0 %v691
        %704 = vmatmul.bf16.gmra.mxu0 %v694
        %v705 = vpop.f32.mrf.mxu0
        %v706 = vadd.f32 0.0, %v705
        %v707 = vpop.f32.mrf.mxu0
        %v708 = vadd.f32 0.0, %v707
        %709 = vdwg.mxu0
        %710 = vrot.lane.b32.xlu0 %v639, 120
        %v711 = vpop.permute.xlu0 %710
        %712 = vrot.lane.b32.xlu0 %v644, 120
        %v713 = vpop.permute.xlu0 %712
        %v715 = vsel %vm645, %v711, 0
        %v718 = vsel %vm645, %v713, 0
        %720 = vmatpush.bf16.xpose.msra.mxu0 0
        %721 = vmatpush.bf16.xpose.msra.mxu0 0
        %722 = vmatpush.bf16.xpose.msra.mxu0 0
        %723 = vmatpush.bf16.xpose.msra.mxu0 0
        %724 = vmatpush.bf16.xpose.msra.mxu0 0
        %725 = vmatpush.bf16.xpose.msra.mxu0 0
        %726 = vmatpush.bf16.xpose.msra.mxu0 0
        %727 = vmatpush.bf16.xpose.msra.mxu0 %v718
        %728 = vmatmul.bf16.gmra.mxu0 %v715
        %v729 = vpop.f32.mrf.mxu0
        %v730 = vadd.f32 0.0, %v729
        %v731 = vpop.f32.mrf.mxu0
        %v732 = vadd.f32 0.0, %v731
        %733 = vdwg.mxu0
        %v734 = vsel %vm666, %v730, -inf
        %735 = vmax.xlane.f32.xlu0 %v734
        %v736 = vpop.xlane.xlu0 %735
        %v737 = vsel %vm666, %v732, -inf
        %738 = vmax.xlane.f32.xlu0 %v737
        %v739 = vpop.xlane.xlu0 %738
        %v740 = vsub.f32 %v730, %v736
        %v741 = vsub.f32 %v732, %v739
        %v742 = vmul.f32 %v740, 1.442695
        %v743 = vpow.pop %v742
        %v744 = vmul.f32 %v741, 1.442695
        %v745 = vpow.pop %v744
        %v746 = vsel %vm666, %v743, 0.0
        %747 = vadd.xlane.f32.xlu0 %v746
        %v748 = vpop.xlane.xlu0 %747
        %v749 = vsel %vm666, %v745, 0.0
        %750 = vadd.xlane.f32.xlu0 %v749
        %v751 = vpop.xlane.xlu0 %750
        %v752 = vrcp.pop %v748
        %v753 = vrcp.pop %v751
        %v754 = vmul.f32 %v743, %v752
        %v755 = vmul.f32 %v745, %v753
        %v756 = vpack.c.bf16 %v755, %v754
        %757 = vrot.lane.b32.xlu0 %v644, 88
        %v758 = vpop.permute.xlu0 %757
        %v761 = vsel %vm666, %v756, 0
        %763 = vmatpush.bf16.msra.mxu0 0
        %764 = vmatpush.bf16.msra.mxu0 0
        %765 = vmatpush.bf16.msra.mxu0 0
        %766 = vmatpush.bf16.msra.mxu0 0
        %767 = vmatpush.bf16.msra.mxu0 0
        %768 = vmatpush.bf16.msra.mxu0 0
        %769 = vmatpush.bf16.msra.mxu0 0
        %770 = vmatpush.bf16.msra.mxu0 %v758
        %771 = vmatmul.bf16.gmra.mxu0 %v761
        %v772 = vpop.f32.mrf.mxu0
        %v773 = vadd.f32 0.0, %v772
        %v774 = vpop.f32.mrf.mxu0
        %v775 = vadd.f32 0.0, %v774
        %776 = vdwg.mxu0
        %777 = vrot.lane.b32.xlu0 %v639, 112
        %v778 = vpop.permute.xlu0 %777
        %779 = vrot.lane.b32.xlu0 %v644, 112
        %v780 = vpop.permute.xlu0 %779
        %v782 = vsel %vm645, %v778, 0
        %v785 = vsel %vm645, %v780, 0
        %787 = vmatpush.bf16.xpose.msra.mxu0 0
        %788 = vmatpush.bf16.xpose.msra.mxu0 0
        %789 = vmatpush.bf16.xpose.msra.mxu0 0
        %790 = vmatpush.bf16.xpose.msra.mxu0 0
        %791 = vmatpush.bf16.xpose.msra.mxu0 0
        %792 = vmatpush.bf16.xpose.msra.mxu0 0
        %793 = vmatpush.bf16.xpose.msra.mxu0 0
        %794 = vmatpush.bf16.xpose.msra.mxu0 %v785
        %795 = vmatmul.bf16.gmra.mxu0 %v782
        %v796 = vpop.f32.mrf.mxu0
        %v797 = vadd.f32 0.0, %v796
        %v798 = vpop.f32.mrf.mxu0
        %v799 = vadd.f32 0.0, %v798
        %800 = vdwg.mxu0
        %v801 = vsel %vm666, %v797, -inf
        %802 = vmax.xlane.f32.xlu0 %v801
        %v803 = vpop.xlane.xlu0 %802
        %v804 = vsel %vm666, %v799, -inf
        %805 = vmax.xlane.f32.xlu0 %v804
        %v806 = vpop.xlane.xlu0 %805
        %v807 = vsub.f32 %v797, %v803
        %v808 = vsub.f32 %v799, %v806
        %v809 = vmul.f32 %v807, 1.442695
        %v810 = vpow.pop %v809
        %v811 = vmul.f32 %v808, 1.442695
        %v812 = vpow.pop %v811
        %v813 = vsel %vm666, %v810, 0.0
        %814 = vadd.xlane.f32.xlu0 %v813
        %v815 = vpop.xlane.xlu0 %814
        %v816 = vsel %vm666, %v812, 0.0
        %817 = vadd.xlane.f32.xlu0 %v816
        %v818 = vpop.xlane.xlu0 %817
        %v819 = vrcp.pop %v815
        %v820 = vrcp.pop %v818
        %v821 = vmul.f32 %v810, %v819
        %v822 = vmul.f32 %v812, %v820
        %v823 = vpack.c.bf16 %v822, %v821
        %824 = vrot.lane.b32.xlu0 %v644, 80
        %v825 = vpop.permute.xlu0 %824
        %v828 = vsel %vm666, %v823, 0
        %830 = vmatpush.bf16.msra.mxu0 0
        %831 = vmatpush.bf16.msra.mxu0 0
        %832 = vmatpush.bf16.msra.mxu0 0
        %833 = vmatpush.bf16.msra.mxu0 0
        %834 = vmatpush.bf16.msra.mxu0 0
        %835 = vmatpush.bf16.msra.mxu0 0
        %836 = vmatpush.bf16.msra.mxu0 0
        %837 = vmatpush.bf16.msra.mxu0 %v825
        %838 = vmatmul.bf16.gmra.mxu0 %v828
        %v839 = vpop.f32.mrf.mxu0
        %v840 = vadd.f32 0.0, %v839
        %v841 = vpop.f32.mrf.mxu0
        %v842 = vadd.f32 0.0, %v841
        %843 = vdwg.mxu0
        %844 = vrot.lane.b32.xlu0 %v639, 104
        %v845 = vpop.permute.xlu0 %844
        %846 = vrot.lane.b32.xlu0 %v644, 104
        %v847 = vpop.permute.xlu0 %846
        %v849 = vsel %vm645, %v845, 0
        %v852 = vsel %vm645, %v847, 0
        %854 = vmatpush.bf16.xpose.msra.mxu0 0
        %855 = vmatpush.bf16.xpose.msra.mxu0 0
        %856 = vmatpush.bf16.xpose.msra.mxu0 0
        %857 = vmatpush.bf16.xpose.msra.mxu0 0
        %858 = vmatpush.bf16.xpose.msra.mxu0 0
        %859 = vmatpush.bf16.xpose.msra.mxu0 0
        %860 = vmatpush.bf16.xpose.msra.mxu0 0
        %861 = vmatpush.bf16.xpose.msra.mxu0 %v852
        %862 = vmatmul.bf16.gmra.mxu0 %v849
        %v863 = vpop.f32.mrf.mxu0
        %v864 = vadd.f32 0.0, %v863
        %v865 = vpop.f32.mrf.mxu0
        %v866 = vadd.f32 0.0, %v865
        %867 = vdwg.mxu0
        %v868 = vsel %vm666, %v864, -inf
        %869 = vmax.xlane.f32.xlu0 %v868
        %v870 = vpop.xlane.xlu0 %869
        %v871 = vsel %vm666, %v866, -inf
        %872 = vmax.xlane.f32.xlu0 %v871
        %v873 = vpop.xlane.xlu0 %872
        %v874 = vsub.f32 %v864, %v870
        %v875 = vsub.f32 %v866, %v873
        %v876 = vmul.f32 %v874, 1.442695
        %v877 = vpow.pop %v876
        %v878 = vmul.f32 %v875, 1.442695
        %v879 = vpow.pop %v878
        %v880 = vsel %vm666, %v877, 0.0
        %881 = vadd.xlane.f32.xlu0 %v880
        %v882 = vpop.xlane.xlu0 %881
        %v883 = vsel %vm666, %v879, 0.0
        %884 = vadd.xlane.f32.xlu0 %v883
        %v885 = vpop.xlane.xlu0 %884
        %v886 = vrcp.pop %v882
        %v887 = vrcp.pop %v885
        %v888 = vmul.f32 %v877, %v886
        %v889 = vmul.f32 %v879, %v887
        %v890 = vpack.c.bf16 %v889, %v888
        %891 = vrot.lane.b32.xlu0 %v644, 72
        %v892 = vpop.permute.xlu0 %891
        %v895 = vsel %vm666, %v890, 0
        %897 = vmatpush.bf16.msra.mxu0 0
        %898 = vmatpush.bf16.msra.mxu0 0
        %899 = vmatpush.bf16.msra.mxu0 0
        %900 = vmatpush.bf16.msra.mxu0 0
        %901 = vmatpush.bf16.msra.mxu0 0
        %902 = vmatpush.bf16.msra.mxu0 0
        %903 = vmatpush.bf16.msra.mxu0 0
        %904 = vmatpush.bf16.msra.mxu0 %v892
        %905 = vmatmul.bf16.gmra.mxu0 %v895
        %v906 = vpop.f32.mrf.mxu0
        %v907 = vadd.f32 0.0, %v906
        %v908 = vpop.f32.mrf.mxu0
        %v909 = vadd.f32 0.0, %v908
        %910 = vdwg.mxu0
        %913 = vrot.lane.b32.xlu0 %v773, 8
        %v914 = vpop.permute.xlu0 %913
        %915 = vrot.lane.b32.xlu0 %v775, 8
        %v916 = vpop.permute.xlu0 %915
        %921 = vrot.lane.b32.xlu0 %v840, 16
        %v922 = vpop.permute.xlu0 %921
        %923 = vrot.lane.b32.xlu0 %v842, 16
        %v924 = vpop.permute.xlu0 %923
        %929 = vrot.lane.b32.xlu0 %v907, 24
        %v930 = vpop.permute.xlu0 %929
        %931 = vrot.lane.b32.xlu0 %v909, 24
        %v932 = vpop.permute.xlu0 %931
        %v935 = vsel %vm645, %v706, %v914
        %v936 = vsel %vm645, %v708, %v916
        %v937 = vsel %vm666, %v935, %v922
        %v938 = vsel %vm666, %v936, %v924
        %vm939 = vcmask 195584
        %v940 = vsel %vm939, %v937, %v930
        %v941 = vsel %vm939, %v938, %v932
        %v942 = vpack.c.bf16 %v941, %v940
        %v943 = vld [vmem:[#allocation2] sm:$0xf]
        %v944 = vld [vmem:[#allocation2 + $0x4] sm:$0xf]
        %v945 = vld [vmem:[#allocation2 + $0x8] sm:$0xf]
        %v946 = vld [vmem:[#allocation2 + $0xc] sm:$0xf]
        %v947 = vld [vmem:[%s5] sm:$0x1]
        %v949 = vperm.slane %v947, 0
        %v955 = vunpack.c.l.b16 %v943
        %v956 = vunpack.c.l.b16 %v944
        %v957 = vunpack.c.l.b16 %v945
        %v958 = vunpack.c.l.b16 %v946
        %v959 = vpack.c.b16 %v956, %v955
        %v960 = vpack.c.b16 %v958, %v957
        %v964 = vsel %vm573, %v942, 0
        %966 = vmatpush.bf16.msra.mxu0 0
        %967 = vmatpush.bf16.msra.mxu0 0
        %968 = vmatpush.bf16.msra.mxu0 0
        %969 = vmatpush.bf16.msra.mxu0 0
        %970 = vmatpush.bf16.msra.mxu0 0
        %971 = vmatpush.bf16.msra.mxu0 0
        %972 = vmatpush.bf16.msra.mxu0 %v960
        %973 = vmatpush.bf16.msra.mxu0 %v959
        %974 = vmatmul.bf16.gmra.mxu0 %v964
        %v975 = vpop.f32.mrf.mxu0
        %v976 = vadd.f32 %v949, %v975
        %v977 = vpop.f32.mrf.mxu0
        %v978 = vadd.f32 %v949, %v977
        %979 = vdwg.mxu0
        %v980 = vld [vmem:[%s6] sm:$0x1]
        %v981 = vld [vmem:[%s7] sm:$0x1]
        %v982 = vsel %vm573, %v976, 0.0
        %983 = vadd.xlane.f32.xlu0 %v982
        %v984 = vpop.xlane.xlu0 %983
        %v985 = vsel %vm573, %v978, 0.0
        %986 = vadd.xlane.f32.xlu0 %v985
        %v987 = vpop.xlane.xlu0 %986
        %v988 = vrcp.pop 32.0
        %v989 = vmul.f32 32.0, %v988
        %v990 = vsub.f32 1.0, %v989
        %v991 = vmul.f32 %v988, %v990
        %v992 = vadd.f32 %v988, %v991
        %vm993 = vweird.f32 %v988
        %v994 = vsel %vm993, %v988, %v992
        %v995 = vmul.f32 %v984, %v994
        %v996 = vmul.f32 %v987, %v994
        %v997 = vsub.f32 %v976, %v995
        %v998 = vsub.f32 %v978, %v996
        %v999 = vmul.f32 %v997, %v997
        %v1000 = vmul.f32 %v998, %v998
        %v1001 = vsel %vm573, %v999, 0.0
        %1002 = vadd.xlane.f32.xlu0 %v1001
        %v1003 = vpop.xlane.xlu0 %1002
        %v1004 = vsel %vm573, %v1000, 0.0
        %1005 = vadd.xlane.f32.xlu0 %v1004
        %v1006 = vpop.xlane.xlu0 %1005
        %v1007 = vmul.f32 %v1003, %v994
        %v1008 = vmul.f32 %v1006, %v994
        %v1009 = vadd.f32 %v1007, 1e-05
        %v1010 = vadd.f32 %v1008, 1e-05
        %v1011 = vrsqrt.pop %v1009
        %v1012 = vmul.f32 %v1011, %v1009
        %v1013 = vmul.f32 %v1012, %v1011
        %v1014 = vmul.f32 0.5, %v1013
        %v1015 = vsub.f32 1.5, %v1014
        %v1016 = vmul.f32 %v1011, %v1015
        %vm1017 = vweird.f32 %v1009
        %vm1018 = vweird.f32 %v1011
        %vm1019 = vmor %vm1017, %vm1018
        %v1020 = vsel %vm1019, %v1011, %v1016
        %v1021 = vrsqrt.pop %v1010
        %v1022 = vmul.f32 %v1021, %v1010
        %v1023 = vmul.f32 %v1022, %v1021
        %v1024 = vmul.f32 0.5, %v1023
        %v1025 = vsub.f32 1.5, %v1024
        %v1026 = vmul.f32 %v1021, %v1025
        %vm1027 = vweird.f32 %v1010
        %vm1028 = vweird.f32 %v1021
        %vm1029 = vmor %vm1027, %vm1028
        %v1030 = vsel %vm1029, %v1021, %v1026
        %v1031 = vmul.f32 %v997, %v1020
        %v1032 = vmul.f32 %v998, %v1030
        %v1034 = vperm.slane %v980, 0
        %v1036 = vmul.f32 %v1031, %v1034
        %v1037 = vmul.f32 %v1032, %v1034
        %v1039 = vperm.slane %v981, 0
        %v1041 = vadd.f32 %v1036, %v1039
        %v1042 = vadd.f32 %v1037, %v1039
        %v1043 = vadd.f32 %v552, %v1041
        %v1044 = vadd.f32 %v553, %v1042
        %v1045 = vpack.c.bf16 %v1044, %v1043
        %v1046 = vld [vmem:[#allocation5] sm:$0xf]
        %v1047 = vld [vmem:[#allocation5 + $0x4] sm:$0xf]
        %v1048 = vld [vmem:[#allocation5 + $0x8] sm:$0xf]
        %v1049 = vld [vmem:[#allocation5 + $0xc] sm:$0xf]
        %v1050 = vld [vmem:[%s9] sm:$0x1]
        %v1052 = vperm.slane %v1050, 0
        %v1058 = vunpack.c.l.b16 %v1046
        %v1059 = vunpack.c.l.b16 %v1047
        %v1060 = vunpack.c.l.b16 %v1048
        %v1061 = vunpack.c.l.b16 %v1049
        %v1062 = vpack.c.b16 %v1059, %v1058
        %v1063 = vpack.c.b16 %v1061, %v1060
        %v1067 = vsel %vm573, %v1045, 0
        %1069 = vmatpush.bf16.msra.mxu0 0
        %1070 = vmatpush.bf16.msra.mxu0 0
        %1071 = vmatpush.bf16.msra.mxu0 0
        %1072 = vmatpush.bf16.msra.mxu0 0
        %1073 = vmatpush.bf16.msra.mxu0 0
        %1074 = vmatpush.bf16.msra.mxu0 0
        %1075 = vmatpush.bf16.msra.mxu0 %v1063
        %1076 = vmatpush.bf16.msra.mxu0 %v1062
        %1077 = vmatmul.bf16.gmra.mxu0 %v1067
        %v1078 = vpop.f32.mrf.mxu0
        %v1079 = vadd.f32 %v1052, %v1078
        %v1080 = vpop.f32.mrf.mxu0
        %v1081 = vadd.f32 %v1052, %v1080
        %1082 = vdwg.mxu0
        %v1083 = vmul.f32 %v1079, %v1079
        %v1084 = vmul.f32 %v1081, %v1081
        %v1085 = vmul.f32 %v1079, %v1083
        %v1086 = vmul.f32 %v1081, %v1084
        %v1087 = vmul.f32 %v1085, 0.044715
        %v1088 = vmul.f32 %v1086, 0.044715
        %v1089 = vadd.f32 %v1079, %v1087
        %v1090 = vadd.f32 %v1081, %v1088
        %v1091 = vmul.f32 %v1089, 0.7978846
        %v1092 = vmul.f32 %v1090, 0.7978846
        %v1093 = vtanh.pop %v1091
        %v1094 = vtanh.pop %v1092
        %v1095 = vadd.f32 %v1093, 1.0
        %v1096 = vadd.f32 %v1094, 1.0
        %v1097 = vmul.f32 %v1095, 0.5
        %v1098 = vmul.f32 %v1096, 0.5
        %v1099 = vmul.f32 %v1079, %v1097
        %v1100 = vmul.f32 %v1081, %v1098
        %v1101 = vpack.c.bf16 %v1100, %v1099
        %v1102 = vld [vmem:[%s10] sm:$0xf]
        %v1103 = vld [vmem:[%s10 + $0x4] sm:$0xf]
        %v1104 = vld [vmem:[%s10 + $0x8] sm:$0xf]
        %v1105 = vld [vmem:[%s10 + $0xc] sm:$0xf]
        %v1106 = vld [vmem:[%s10 + $0x10] sm:$0xf]
        %v1107 = vld [vmem:[%s10 + $0x14] sm:$0xf]
        %v1108 = vld [vmem:[%s10 + $0x18] sm:$0xf]
        %v1109 = vld [vmem:[%s10 + $0x1c] sm:$0xf]
        %v1110 = vld [vmem:[%s10 + $0x20] sm:$0xf]
        %v1111 = vld [vmem:[%s10 + $0x24] sm:$0xf]
        %v1112 = vld [vmem:[%s10 + $0x28] sm:$0xf]
        %v1113 = vld [vmem:[%s10 + $0x2c] sm:$0xf]
        %v1114 = vld [vmem:[%s10 + $0x30] sm:$0xf]
        %v1115 = vld [vmem:[%s10 + $0x34] sm:$0xf]
        %v1116 = vld [vmem:[%s10 + $0x38] sm:$0xf]
        %v1117 = vld [vmem:[%s10 + $0x3c] sm:$0xf]
        %v1118 = vld [vmem:[%s11] sm:$0x1]
        %v1120 = vperm.slane %v1118, 0
        %v1138 = vunpack.c.l.b16 %v1102
        %v1139 = vunpack.c.l.b16 %v1103
        %v1140 = vunpack.c.l.b16 %v1104
        %v1141 = vunpack.c.l.b16 %v1105
        %v1142 = vunpack.c.l.b16 %v1106
        %v1143 = vunpack.c.l.b16 %v1107
        %v1144 = vunpack.c.l.b16 %v1108
        %v1145 = vunpack.c.l.b16 %v1109
        %v1146 = vunpack.c.l.b16 %v1110
        %v1147 = vunpack.c.l.b16 %v1111
        %v1148 = vunpack.c.l.b16 %v1112
        %v1149 = vunpack.c.l.b16 %v1113
        %v1150 = vunpack.c.l.b16 %v1114
        %v1151 = vunpack.c.l.b16 %v1115
        %v1152 = vunpack.c.l.b16 %v1116
        %v1153 = vunpack.c.l.b16 %v1117
        %v1154 = vpack.c.b16 %v1139, %v1138
        %v1155 = vpack.c.b16 %v1141, %v1140
        %v1156 = vpack.c.b16 %v1143, %v1142
        %v1157 = vpack.c.b16 %v1145, %v1144
        %v1158 = vpack.c.b16 %v1147, %v1146
        %v1159 = vpack.c.b16 %v1149, %v1148
        %v1160 = vpack.c.b16 %v1151, %v1150
        %v1161 = vpack.c.b16 %v1153, %v1152
        %1170 = vmatpush.bf16.msra.mxu0 %v1161
        %1171 = vmatpush.bf16.msra.mxu0 %v1160
        %1172 = vmatpush.bf16.msra.mxu0 %v1159
        %1173 = vmatpush.bf16.msra.mxu0 %v1158
        %1174 = vmatpush.bf16.msra.mxu0 %v1157
        %1175 = vmatpush.bf16.msra.mxu0 %v1156
        %1176 = vmatpush.bf16.msra.mxu0 %v1155
        %1177 = vmatpush.bf16.msra.mxu0 %v1154
        %1178 = vmatmul.bf16.gmra.mxu0 %v1101
        %v1179 = vpop.f32.mrf.mxu0
        %v1180 = vadd.f32 %v1120, %v1179
        %v1181 = vpop.f32.mrf.mxu0
        %v1182 = vadd.f32 %v1120, %v1181
        %1183 = vdwg.mxu0
        %v1184 = vld [vmem:[%s12] sm:$0x1]
        %v1185 = vld [vmem:[%s13] sm:$0x1]
        %v1186 = vsel %vm573, %v1180, 0.0
        %1187 = vadd.xlane.f32.xlu0 %v1186
        %v1188 = vpop.xlane.xlu0 %1187
        %v1189 = vsel %vm573, %v1182, 0.0
        %1190 = vadd.xlane.f32.xlu0 %v1189
        %v1191 = vpop.xlane.xlu0 %1190
        %v1192 = vmul.f32 %v1188, %v994
        %v1193 = vmul.f32 %v1191, %v994
        %v1194 = vsub.f32 %v1180, %v1192
        %v1195 = vsub.f32 %v1182, %v1193
        %v1196 = vmul.f32 %v1194, %v1194
        %v1197 = vmul.f32 %v1195, %v1195
        %v1198 = vsel %vm573, %v1196, 0.0
        %1199 = vadd.xlane.f32.xlu0 %v1198
        %v1200 = vpop.xlane.xlu0 %1199
        %v1201 = vsel %vm573, %v1197, 0.0
        %1202 = vadd.xlane.f32.xlu0 %v1201
        %v1203 = vpop.xlane.xlu0 %1202
        %v1204 = vmul.f32 %v1200, %v994
        %v1205 = vmul.f32 %v1203, %v994
        %v1206 = vadd.f32 %v1204, 1e-05
        %v1207 = vadd.f32 %v1205, 1e-05
        %v1208 = vrsqrt.pop %v1206
        %v1209 = vmul.f32 %v1208, %v1206
        %v1210 = vmul.f32 %v1209, %v1208
        %v1211 = vmul.f32 0.5, %v1210
        %v1212 = vsub.f32 1.5, %v1211
        %v1213 = vmul.f32 %v1208, %v1212
        %vm1214 = vweird.f32 %v1206
        %vm1215 = vweird.f32 %v1208
        %vm1216 = vmor %vm1214, %vm1215
        %v1217 = vsel %vm1216, %v1208, %v1213
        %v1218 = vrsqrt.pop %v1207
        %v1219 = vmul.f32 %v1218, %v1207
        %v1220 = vmul.f32 %v1219, %v1218
        %v1221 = vmul.f32 0.5, %v1220
        %v1222 = vsub.f32 1.5, %v1221
        %v1223 = vmul.f32 %v1218, %v1222
        %vm1224 = vweird.f32 %v1207
        %vm1225 = vweird.f32 %v1218
        %vm1226 = vmor %vm1224, %vm1225
        %v1227 = vsel %vm1226, %v1218, %v1223
        %v1228 = vmul.f32 %v1194, %v1217
        %v1229 = vmul.f32 %v1195, %v1227
        %v1231 = vperm.slane %v1184, 0
        %v1233 = vmul.f32 %v1228, %v1231
        %v1234 = vmul.f32 %v1229, %v1231
        %v1236 = vperm.slane %v1185, 0
        %v1238 = vadd.f32 %v1233, %v1236
        %v1239 = vadd.f32 %v1234, %v1236
        %v1240 = vadd.f32 %v1043, %v1238
        %v1241 = vadd.f32 %v1044, %v1239
        %1242 = vst.msk [vmem:[%s534] sm:$0xff] %vm573, %v1240
        %1243 = vst.msk [vmem:[%s534 + $0x8] sm:$0xff] %vm573, %v1241
        %s1244 = sand.u32 %s358, 1
        %s1245 = scalar_lea.sflag [#allocation4], %s1244
        %s1246 = sand.u32 %s358, 1
        %s1247 = smul.addr %s1246, 16
        %s1248 = scalar_lea.vmem [#allocation7], %s1247
        // Predicated region
        $region85: #{tpu_custom_call.1} parent=75 // pred_check
          %p1249 = pneg %p368
        $region86: #{tpu_custom_call.1} parent=75 // pred_check_branch
          %1251 = sbr.rel (%p1249) target = $region88
        $region87: #{tpu_custom_call.1} parent=75 // pred_region
          %s1252 = smul.u32 2, %s35
          %1254 = vsyncadd %s1245, 0
          %s1255 = smul.addr %s34, 2
          %s1256 = sadd.s32 %s1252, %s1255
          %s1257 = smul.addr %s1256, 8
          %s1258 = scalar_lea.hbm %s14, %s1257
          %s1259 = sshll.u32 %s1248, 4
          %s1260 = int_to_ptr.vmem [resolvable:$true] %s1259
          %s1261 = sshll.u32 %s1258, 4
          %s1262 = int_to_ptr.hbm [resolvable:$true] %s1261
          %1267 = dma.vmem_to_hbm [thread:$0]  %s1260, 256, %s1262, %s1245, 128, 128, 8
        $region88: #{tpu_custom_call.1} parent=75 // pred_fallthru
          _
      $region76: #{tpu_custom_call.1} parent=5 // pred_fallthru
        _
      %p1268 = scmp.le.s32.totalorder 2, %s25
      // Predicated region
      $region89: #{tpu_custom_call.1} parent=5 // pred_check
        %p1269 = pneg %p1268
      $region90: #{tpu_custom_call.1} parent=5 // pred_check_branch
        %1271 = sbr.rel (%p1269) target = $region92
      $region91: #{tpu_custom_call.1} parent=5 // pred_region
        %s1272 = ssub.s32 %s25, 2
        // Predicated region
        $region93: #{tpu_custom_call.1} parent=91 // pred_check
          %p1273 = pneg %p374
        $region94: #{tpu_custom_call.1} parent=91 // pred_check_branch
          %1275 = sbr.rel (%p1273) target = $region96
        $region95: #{tpu_custom_call.1} parent=91 // pred_region
          %s1276 = sand.u32 %s359, 1
          %s1277 = scalar_lea.sflag [#allocation4], %s1276
          %s1278 = sand.u32 %s359, 1
          %s1279 = smul.addr %s1278, 16
          %s1280 = scalar_lea.vmem [#allocation7], %s1279
          %1282 = dma.done %s1277, 256
        $region96: #{tpu_custom_call.1} parent=91 // pred_fallthru
          _
      $region92: #{tpu_custom_call.1} parent=5 // pred_fallthru
        _
    $region6: #{tpu_custom_call.1} parent=1 // loop_footer
      %s29 = sadd.s32 1, %s25
    $region7: #{tpu_custom_call.1} parent=1 // loop_footer_branch
      %24 = sbr.rel target = $region3
    $region8: #{tpu_custom_call.1} parent=1 // loop_exit
      _
    %1283 = vsyncpa [#allocation3], 1
    %s1284 = scalar_lea.sflag [#allocation3], 1
    %1285 = vsyncpa %s1284, 1
    %1286 = vsyncpa [#allocation6], 1
    %1287 = vsyncpa [#allocation4], 1
    %s1288 = scalar_lea.sflag [#allocation4], 1
    %1289 = vsyncpa %s1288, 1

</llo_original>
